<compile_context>
chip_gen: v7x
topology: tpu7x:2x2x1
jax: 0.10.0
libtpu: 0.0.40
codegen_flags: <defaults>
</compile_context>

<pallas_src>
import functools

import jax
import jax.numpy as jnp
from jax import lax
from jax.experimental import pallas as pl
from jax.experimental.pallas import tpu as pltpu

_MIB = 1024 * 1024

# Mutable switch: single-buffer grid-constant operands (pl.Buffered(1)).  If
# the installed Pallas rejects pipeline_mode at lowering time, the caller
# flips this flag and retries (see __main__).
_SINGLE_BUFFER_CONSTS = [True]


def _const_spec(block_shape, index_map):
    """BlockSpec for operands whose block never changes across the grid.

    Double-buffering buys nothing for them, so request a single buffer
    (reclaims VMEM -- most valuable on v7x's 64 MiB/TC).  Falls back to the
    default spec if pipeline_mode / pl.Buffered is unavailable.
    """
    if _SINGLE_BUFFER_CONSTS[0]:
        try:
            return pl.BlockSpec(block_shape, index_map,
                                pipeline_mode=pl.Buffered(1))
        except Exception:
            _SINGLE_BUFFER_CONSTS[0] = False
    return pl.BlockSpec(block_shape, index_map)


def _device_kind():
    try:
        return jax.devices()[0].device_kind.lower()
    except Exception:
        return ""


def _is_pre_v6(kind):
    return any(v in kind for v in ("v2", "v3", "v4", "v5"))


def _pick_tile(n, target):
    """Largest multiple of 8 that divides n and is <= target, else n itself.

    Tiles that are neither multiples of 8 nor the full extent would violate
    the (8,128) BlockSpec divisibility rule.
    """
    t = min(n, target)
    for cand in range(t - t % 8, 7, -8):
        if n % cand == 0:
            return cand
    return n


def _ceil_to(n, m):
    return ((n + m - 1) // m) * m


# ---------------------------------------------------------------------------
# Kernel 1a: fused GroupNorm-affine + QKV projection (self-attention, y=None).
# ---------------------------------------------------------------------------
def _qkv_self_kernel(x_ref, aff_ref, w_ref, b_ref, q_ref, k_ref, v_ref, *,
                     head_size, att):
    C = head_size * att
    x = x_ref[0]                              # (TN, C) bf16
    aff = aff_ref[0]                          # (8, C)  f32: [scale_x, shift_x]
    xn = (x * aff[0:1, :] + aff[1:2, :]).astype(jnp.bfloat16)   # norm1(x)
    qkv = jnp.dot(xn, w_ref[...],
                  preferred_element_type=jnp.float32) + b_ref[0:1, :]
    # Re-layout once here to head-major (head, TN, att); the flash kernel then
    # reads each head as a free leading-axis view every (qi, ki) step.
    # TODO(synk): optionally pad att up to 128 for fully lane-dense slabs.
    for hd in range(head_size):
        lo = hd * att
        q_ref[0, hd] = qkv[:, lo:lo + att].astype(jnp.bfloat16)
        k_ref[0, hd] = qkv[:, C + lo:C + lo + att].astype(jnp.bfloat16)
        v_ref[0, hd] = qkv[:, 2 * C + lo:2 * C + lo + att].astype(jnp.bfloat16)


# ---------------------------------------------------------------------------
# Kernel 1b: cross-attention variant (separate context input y).
# ---------------------------------------------------------------------------
def _qkv_cross_kernel(x_ref, y_ref, aff_ref, wq_ref, wkv_ref, b_ref,
                      q_ref, k_ref, v_ref, *, head_size, att):
    C = head_size * att
    x = x_ref[0]                              # (TN, C) bf16
    y = y_ref[0]                              # (TN, C) bf16
    aff = aff_ref[0]                          # (8, C)
    xn = (x * aff[0:1, :] + aff[1:2, :]).astype(jnp.bfloat16)   # norm1(x)->K,V
    yn = (y * aff[2:3, :] + aff[3:4, :]).astype(jnp.bfloat16)   # norm2(y)->Q
    q = jnp.dot(yn, wq_ref[...],
                preferred_element_type=jnp.float32) + b_ref[0:1, 0:C]
    kv = jnp.dot(xn, wkv_ref[...],
                 preferred_element_type=jnp.float32) + b_ref[0:1, C:3 * C]
    for hd in range(head_size):
        lo = hd * att
        q_ref[0, hd] = q[:, lo:lo + att].astype(jnp.bfloat16)
        k_ref[0, hd] = kv[:, lo:lo + att].astype(jnp.bfloat16)
        v_ref[0, hd] = kv[:, C + lo:C + lo + att].astype(jnp.bfloat16)


# ---------------------------------------------------------------------------
# Kernel 2: flash attention (online softmax, head-major state) + output
#           projection + residual, fused into the last K-step epilogue.
# ---------------------------------------------------------------------------
def _flash_attn_kernel(x_ref, q_ref, k_ref, v_ref, wp_ref, bp_ref, o_ref,
                       m_ref, l_ref, acc_ref, *, head_size, exp_dtype):
    ki = pl.program_id(2)
    nk = pl.num_programs(2)

    @pl.when(ki == 0)
    def _init():
        m_ref[...] = jnp.full(m_ref.shape, -1e30, jnp.float32)
        l_ref[...] = jnp.zeros(l_ref.shape, jnp.float32)
        acc_ref[...] = jnp.zeros(acc_ref.shape, jnp.float32)

    def head_step(hd, carry):
        q = q_ref[0, hd]                      # (TQ, att) bf16 (scale pre-folded)
        k = k_ref[0, hd]                      # (TK, att) bf16
        v = v_ref[0, hd]                      # (TK, att) bf16
        # Q @ K^T without an explicit transpose: contract the last dims.
        s = lax.dot_general(q, k, (((1,), (1,)), ((), ())),
                            preferred_element_type=jnp.float32)   # (TQ,TK) f32
        m_prev = m_ref[hd]                                        # (TQ, 1) f32
        m_new = jnp.maximum(m_prev, jnp.max(s, axis=-1, keepdims=True))
        alpha = jnp.exp(m_prev - m_new)                           # f32
        # bf16 exponent on chips with a bf16 EUP (p feeds a bf16 matmul
        # anyway); softmax statistics m/l/alpha stay fp32.
        p = jnp.exp((s - m_new).astype(exp_dtype))                # (TQ, TK)
        l_ref[hd] = alpha * l_ref[hd] + jnp.sum(p, axis=-1, keepdims=True,
                                                dtype=jnp.float32)
        pv = jnp.dot(p.astype(jnp.bfloat16), v,
                     preferred_element_type=jnp.float32)          # (TQ, att)
        acc_ref[hd] = alpha * acc_ref[hd] + pv                    # full-tile RMW
        m_ref[hd] = m_new
        return carry

    lax.fori_loop(0, head_size, head_step, 0, unroll=True)

    @pl.when(ki == nk - 1)
    def _epilogue():
        # Residual + projection bias first, then accumulate each head's
        # normalized output through its slice of the projection weights.
        o_ref[0] = x_ref[0] + bp_ref[0:1, :]                      # fp32

        def proj_step(hd, carry):
            inv_l = pl.reciprocal(l_ref[hd], approx=False)        # exact
            attn = (acc_ref[hd] * inv_l).astype(jnp.bfloat16)     # (TQ, att)
            o_ref[0] = o_ref[0] + jnp.dot(attn, wp_ref[hd],
                                          preferred_element_type=jnp.float32)
            return carry

        lax.fori_loop(0, head_size, proj_step, 0, unroll=True)


# ---------------------------------------------------------------------------
# VMEM footprint estimates (used to size vmem_limit_bytes per generation).
# ---------------------------------------------------------------------------
def _qkv_vmem_bytes(TN, C, head_size, att, cross, nbuf_const):
    lane = lambda n: _ceil_to(n, 128)
    bb = 0
    bb += (2 if cross else 1) * 2 * TN * lane(C) * 2        # x (and y), bf16
    bb += 2 * 8 * lane(C) * 4                               # affine
    bb += nbuf_const * C * lane(3 * C) * 2                  # qkv weights
    bb += nbuf_const * 8 * lane(3 * C) * 4                  # qkv bias
    bb += 3 * 2 * head_size * TN * lane(att) * 2            # q/k/v outputs
    return bb


def _attn_vmem_bytes(TQ, TK, C, head_size, att, nbuf_const):
    lane = lambda n: _ceil_to(n, 128)
    bb = 0
    bb += 2 * TQ * lane(C) * 4                              # x (residual)
    bb += 2 * head_size * TQ * lane(att) * 2                # q
    bb += 2 * 2 * head_size * TK * lane(att) * 2            # k, v
    bb += nbuf_const * head_size * att * lane(C) * 2        # wp
    bb += nbuf_const * 8 * lane(C) * 4                      # bp
    bb += 2 * TQ * lane(C) * 4                              # out
    bb += 2 * head_size * _ceil_to(TQ, 8) * 128 * 4         # m, l (lane-padded)
    bb += head_size * TQ * lane(att) * 4                    # acc
    return bb


def _vmem_limit(block_bytes, kind):
    # v7x has only 64 MiB/TC; leave headroom for Mosaic internal scratch.
    cap = 56 * _MIB if "v7" in kind else 100 * _MIB
    want = int(block_bytes * 1.25) + 8 * _MIB
    return max(24 * _MIB, min(cap, want))


# ---------------------------------------------------------------------------
# GroupNorm folded into per-batch per-channel affine (stats on NCHW, fp32).
# ---------------------------------------------------------------------------
def _group_affine_nchw(t_nchw, gamma, beta, num_groups, eps):
    B, C, H, W = t_nchw.shape
    gs = C // num_groups
    tg = t_nchw.reshape(B, num_groups, gs, H, W).astype(jnp.float32)
    mean = jnp.mean(tg, axis=(2, 3, 4))                                 # (B,G)
    var = jnp.mean(jnp.square(tg - mean[:, :, None, None, None]),
                   axis=(2, 3, 4))                                      # two-pass
    inv = lax.rsqrt(var + eps)
    mean_c = jnp.repeat(mean, gs, axis=1)                               # (B,C)
    inv_c = jnp.repeat(inv, gs, axis=1)
    scale = inv_c * gamma[None, :].astype(jnp.float32)
    shift = beta[None, :].astype(jnp.float32) - mean_c * scale
    return scale, shift


# ---------------------------------------------------------------------------
# Wrapper.
# ---------------------------------------------------------------------------
def multi_head_attn_block(x_nchw, params, y_nchw=None, *, head_size,
                          num_groups=32, eps=1e-6,
                          q_tile=None, k_tile=None, n_tile=None,
                          vmem_limit_bytes=None):
    """Pallas implementation of MultiHeadAttnBlock.forward (NCHW in / out)."""
    B, C, H, W = x_nchw.shape
    assert C % head_size == 0 and C % num_groups == 0
    att = C // head_size
    HW = H * W
    scale = float(att) ** (-0.5)

    kind = _device_kind()
    pre_v6 = _is_pre_v6(kind)
    # bf16 exponent on v6e/v7x (bf16 EUP); keep fp32 exp on v5e and older.
    exp_dtype = jnp.float32 if pre_v6 else jnp.bfloat16
    if q_tile is None:
        q_tile = 512 if "v7" in kind else 1024     # keep 2-TC occupancy on v7x
    if k_tile is None:
        k_tile = 1024 if pre_v6 else 512           # fewer rescale passes on v5e
    if n_tile is None:
        n_tile = 1024 if "v7" in kind else 2048

    TN = _pick_tile(HW, n_tile)
    TQ = _pick_tile(HW, q_tile)
    TK = _pick_tile(HW, k_tile)

    to_seq = lambda t: jnp.transpose(t, (0, 2, 3, 1)).reshape(B, HW, C)
    # bf16 sequence copy for the QKV kernel (its matmul operands are bf16);
    # the fp32 copy is kept only as the residual input of the attention kernel.
    x_seq_bf16 = to_seq(x_nchw).astype(jnp.bfloat16)
    x_seq_f32 = to_seq(x_nchw).astype(jnp.float32)

    # GroupNorm statistics reduced directly on the NCHW tensor.
    sx, tx = _group_affine_nchw(x_nchw, params["gamma1"], params["beta1"],
                                num_groups, eps)

    # Conv1x1: out = in @ W.T.  Fold the 1/sqrt(att) scale into Wq / bq.
    wq_t = params["wq"].astype(jnp.float32).T * scale
    wk_t = params["wk"].astype(jnp.float32).T
    wv_t = params["wv"].astype(jnp.float32).T
    wp_heads = (params["wp"].astype(jnp.float32).T
                .reshape(head_size, att, C).astype(jnp.bfloat16))
    bqkv = jnp.concatenate([params["bq"].astype(jnp.float32) * scale,
                            params["bk"].astype(jnp.float32),
                            params["bv"].astype(jnp.float32)], axis=0)
    b_arr = jnp.zeros((8, 3 * C), jnp.float32).at[0].set(bqkv)
    bp_arr = jnp.zeros((8, C), jnp.float32).at[0].set(
        params["bp"].astype(jnp.float32))

    nbuf_const = 1 if _SINGLE_BUFFER_CONSTS[0] else 2

    qkv_out_shape = tuple(
        jax.ShapeDtypeStruct((B, head_size, HW, att), jnp.bfloat16)
        for _ in range(3))
    qkv_out_specs = [pl.BlockSpec((1, head_size, TN, att),
                                  lambda b, t: (b, 0, t, 0))
                     for _ in range(3)]

    qkv_vmem = (vmem_limit_bytes if vmem_limit_bytes is not None else
                _vmem_limit(_qkv_vmem_bytes(TN, C, head_size, att,
                                            y_nchw is not None, nbuf_const),
                            kind))
    cparams_qkv = pltpu.CompilerParams(
        dimension_semantics=("parallel", "parallel"),
        vmem_limit_bytes=qkv_vmem)

    if y_nchw is None:
        # Self-attention path: x read once (bf16), normalized once, fused
        # (TN,C)@(C,3C) QKV matmul.
        aff = jnp.zeros((B, 8, C), jnp.float32)
        aff = aff.at[:, 0, :].set(sx).at[:, 1, :].set(tx)
        wqkv = jnp.concatenate([wq_t, wk_t, wv_t], axis=1).astype(jnp.bfloat16)
        q, k, v = pl.pallas_call(
            functools.partial(_qkv_self_kernel, head_size=head_size, att=att),
            out_shape=qkv_out_shape,
            grid_spec=pltpu.PrefetchScalarGridSpec(
                num_scalar_prefetch=0,
                grid=(B, HW // TN),
                in_specs=[
                    pl.BlockSpec((1, TN, C), lambda b, t: (b, t, 0)),   # x
                    pl.BlockSpec((1, 8, C), lambda b, t: (b, 0, 0)),    # affine
                    _const_spec((C, 3 * C), lambda b, t: (0, 0)),       # wqkv
                    _const_spec((8, 3 * C), lambda b, t: (0, 0)),       # bias
                ],
                out_specs=qkv_out_specs),
            compiler_params=cparams_qkv,
        )(x_seq_bf16, aff, wqkv, b_arr)
    else:
        y_seq_bf16 = to_seq(y_nchw).astype(jnp.bfloat16)
        sy, ty = _group_affine_nchw(y_nchw, params["gamma2"], params["beta2"],
                                    num_groups, eps)
        aff = jnp.zeros((B, 8, C), jnp.float32)
        aff = (aff.at[:, 0, :].set(sx).at[:, 1, :].set(tx)
                  .at[:, 2, :].set(sy).at[:, 3, :].set(ty))
        wq_b = wq_t.astype(jnp.bfloat16)
        wkv = jnp.concatenate([wk_t, wv_t], axis=1).astype(jnp.bfloat16)
        q, k, v = pl.pallas_call(
            functools.partial(_qkv_cross_kernel, head_size=head_size, att=att),
            out_shape=qkv_out_shape,
            grid_spec=pltpu.PrefetchScalarGridSpec(
                num_scalar_prefetch=0,
                grid=(B, HW // TN),
                in_specs=[
                    pl.BlockSpec((1, TN, C), lambda b, t: (b, t, 0)),   # x
                    pl.BlockSpec((1, TN, C), lambda b, t: (b, t, 0)),   # y
                    pl.BlockSpec((1, 8, C), lambda b, t: (b, 0, 0)),    # affine
                    _const_spec((C, C), lambda b, t: (0, 0)),           # wq
                    _const_spec((C, 2 * C), lambda b, t: (0, 0)),       # wkv
                    _const_spec((8, 3 * C), lambda b, t: (0, 0)),       # bias
                ],
                out_specs=qkv_out_specs),
            compiler_params=cparams_qkv,
        )(x_seq_bf16, y_seq_bf16, aff, wq_b, wkv, b_arr)

    # --- Flash attention + projection + residual -----------------------------
    attn_vmem = (vmem_limit_bytes if vmem_limit_bytes is not None else
                 _vmem_limit(_attn_vmem_bytes(TQ, TK, C, head_size, att,
                                              nbuf_const), kind))
    attn_kernel = functools.partial(_flash_attn_kernel,
                                    head_size=head_size, exp_dtype=exp_dtype)
    out = pl.pallas_call(
        attn_kernel,
        out_shape=jax.ShapeDtypeStruct((B, HW, C), jnp.float32),
        grid_spec=pltpu.PrefetchScalarGridSpec(
            num_scalar_prefetch=0,
            grid=(B, HW // TQ, HW // TK),
            in_specs=[
                pl.BlockSpec((1, TQ, C), lambda b, qi, ki: (b, qi, 0)),        # x
                pl.BlockSpec((1, head_size, TQ, att),
                             lambda b, qi, ki: (b, 0, qi, 0)),                 # q
                pl.BlockSpec((1, head_size, TK, att),
                             lambda b, qi, ki: (b, 0, ki, 0)),                 # k
                pl.BlockSpec((1, head_size, TK, att),
                             lambda b, qi, ki: (b, 0, ki, 0)),                 # v
                _const_spec((head_size, att, C), lambda b, qi, ki: (0, 0, 0)), # wp
                _const_spec((8, C), lambda b, qi, ki: (0, 0)),                 # bp
            ],
            out_specs=pl.BlockSpec((1, TQ, C), lambda b, qi, ki: (b, qi, 0)),
            scratch_shapes=[
                pltpu.VMEM((head_size, TQ, 1), jnp.float32),    # running max
                pltpu.VMEM((head_size, TQ, 1), jnp.float32),    # running sum
                pltpu.VMEM((head_size, TQ, att), jnp.float32),  # output accum
            ]),
        compiler_params=pltpu.CompilerParams(
            dimension_semantics=("parallel", "parallel", "arbitrary"),
            vmem_limit_bytes=attn_vmem),
    )(x_seq_f32, q, k, v, wp_heads, bp_arr)

    return out.reshape(B, H, W, C).transpose(0, 3, 1, 2)


# ---------------------------------------------------------------------------
# Pure-JAX reference (mirrors the PyTorch forward op-for-op) for verification.
# ---------------------------------------------------------------------------
def ref_forward(x, params, y=None, *, head_size, num_groups=32, eps=1e-6):
    B, C, H, W = x.shape
    att = C // head_size
    hw = H * W
    HI = jax.lax.Precision.HIGHEST

    def gn(t, gamma, beta):
        tg = t.reshape(B, num_groups, C // num_groups, H, W)
        mean = tg.mean(axis=(2, 3, 4), keepdims=True)
        var = ((tg - mean) ** 2).mean(axis=(2, 3, 4), keepdims=True)
        tn = ((tg - mean) / jnp.sqrt(var + eps)).reshape(B, C, H, W)
        return tn * gamma[None, :, None, None] + beta[None, :, None, None]

    def conv(t, w, b):
        return jnp.einsum("oc,bchw->bohw", w, t, precision=HI) \
            + b[None, :, None, None]

    h_ = gn(x, params["gamma1"], params["beta1"])
    yv = h_ if y is None else gn(y, params["gamma2"], params["beta2"])
    q = conv(yv, params["wq"], params["bq"])
    k = conv(h_, params["wk"], params["bk"])
    v = conv(h_, params["wv"], params["bv"])

    def split(t):  # (B,C,H,W) -> (B, hw, head, att)
        return jnp.transpose(t.reshape(B, head_size, att, hw), (0, 3, 1, 2))

    qh = jnp.transpose(split(q), (0, 2, 1, 3))          # (B, head, hw, att)
    vh = jnp.transpose(split(v), (0, 2, 1, 3))          # (B, head, hw, att)
    kh = jnp.transpose(split(k), (0, 2, 3, 1))          # (B, head, att, hw)

    scale = att ** (-0.5)
    w_ = jnp.einsum("bhqa,bhak->bhqk", qh * scale, kh, precision=HI)
    w_ = jax.nn.softmax(w_, axis=3)
    w_ = jnp.einsum("bhqk,bhka->bhqa", w_, vh, precision=HI)
    w_ = jnp.transpose(w_, (0, 2, 1, 3)).reshape(B, H, W, C)
    w_ = jnp.transpose(w_, (0, 3, 1, 2))
    w_ = conv(w_, params["wp"], params["bp"])
    return x + w_


if __name__ == "__main__":
    B, C, H, W = 2, 64, 8, 8
    head_size = 4

    key = jax.random.PRNGKey(0)
    keys = jax.random.split(key, 16)
    params = {
        "gamma1": 1.0 + 0.1 * jax.random.normal(keys[0], (C,), jnp.float32),
        "beta1": 0.1 * jax.random.normal(keys[1], (C,), jnp.float32),
        "gamma2": 1.0 + 0.1 * jax.random.normal(keys[2], (C,), jnp.float32),
        "beta2": 0.1 * jax.random.normal(keys[3], (C,), jnp.float32),
        "wq": 0.1 * jax.random.normal(keys[4], (C, C), jnp.float32),
        "bq": 0.1 * jax.random.normal(keys[5], (C,), jnp.float32),
        "wk": 0.1 * jax.random.normal(keys[6], (C, C), jnp.float32),
        "bk": 0.1 * jax.random.normal(keys[7], (C,), jnp.float32),
        "wv": 0.1 * jax.random.normal(keys[8], (C, C), jnp.float32),
        "bv": 0.1 * jax.random.normal(keys[9], (C,), jnp.float32),
        "wp": 0.1 * jax.random.normal(keys[10], (C, C), jnp.float32),
        "bp": 0.1 * jax.random.normal(keys[11], (C,), jnp.float32),
    }
    x = jax.random.normal(keys[12], (B, C, H, W), jnp.float32)
    y = jax.random.normal(keys[13], (B, C, H, W), jnp.float32)

    def run(y_arg):
        return jax.block_until_ready(
            multi_head_attn_block(x, params, y_arg, head_size=head_size))

    try:
        out1 = run(None)   # self-attention path (default in the torch module)
        out2 = run(y)      # explicit-y path (cross attention)
    except Exception:
        # Older Pallas without pipeline_mode / Buffered(1): retry with
        # default double-buffered constant operands.
        _SINGLE_BUFFER_CONSTS[0] = False
        out1 = run(None)
        out2 = run(y)

    ref1 = ref_forward(x, params, None, head_size=head_size)
    ref2 = ref_forward(x, params, y, head_size=head_size)

    assert out1.shape == (B, C, H, W) and out2.shape == (B, C, H, W)
    assert jnp.allclose(out1, ref1, rtol=2e-2, atol=2e-2)
    assert jnp.allclose(out2, ref2, rtol=2e-2, atol=2e-2)

    print("KERNEL_OK")
</pallas_src>

<mosaic_0001>
module attributes {stable_mosaic.version = 11 : i64} {
  func.func @_qkv_self_kernel(%arg0: i32, %arg1: i32, %arg2: memref<1x64x64xbf16, #tpu.memory_space<vmem>>, %arg3: memref<1x8x64xf32, #tpu.memory_space<vmem>>, %arg4: memref<64x192xbf16, #tpu.memory_space<vmem>>, %arg5: memref<8x192xf32, #tpu.memory_space<vmem>>, %arg6: memref<1x4x64x16xbf16, #tpu.memory_space<vmem>>, %arg7: memref<1x4x64x16xbf16, #tpu.memory_space<vmem>>, %arg8: memref<1x4x64x16xbf16, #tpu.memory_space<vmem>>) attributes {dimension_semantics = [#tpu.dimension_semantics<parallel>, #tpu.dimension_semantics<parallel>], iteration_bounds = array<i64: 2, 1>, scalar_prefetch = 0 : i64, scratch_operands = 0 : i64, tpu.core_type = #tpu.core_type<tc>, window_params = [{transform_indices = @transform_0, window_bounds = array<i64: 1, 64, 64>}, {transform_indices = @transform_1, window_bounds = array<i64: 1, 8, 64>}, {pipeline_mode = #tpu.pipeline_mode<synchronous>, transform_indices = @transform_2, window_bounds = array<i64: 64, 192>}, {pipeline_mode = #tpu.pipeline_mode<synchronous>, transform_indices = @transform_3, window_bounds = array<i64: 8, 192>}, {transform_indices = @transform_4, window_bounds = array<i64: 1, 4, 64, 16>}, {transform_indices = @transform_5, window_bounds = array<i64: 1, 4, 64, 16>}, {transform_indices = @transform_6, window_bounds = array<i64: 1, 4, 64, 16>}]} {
    %c0 = arith.constant 0 : index
    %c0_0 = arith.constant 0 : index
    %c0_1 = arith.constant 0 : index
    %0 = vector.load %arg2[%c0, %c0_0, %c0_1] : memref<1x64x64xbf16, #tpu.memory_space<vmem>>, vector<1x64x64xbf16>
    %1 = vector.shape_cast %0 : vector<1x64x64xbf16> to vector<64x64xbf16>
    %c0_2 = arith.constant 0 : index
    %c0_3 = arith.constant 0 : index
    %c0_4 = arith.constant 0 : index
    %2 = vector.load %arg3[%c0_2, %c0_3, %c0_4] : memref<1x8x64xf32, #tpu.memory_space<vmem>>, vector<1x8x64xf32>
    %3 = vector.shape_cast %2 : vector<1x8x64xf32> to vector<8x64xf32>
    %4 = vector.extract_strided_slice %3 {offsets = [0, 0], sizes = [1, 64], strides = [1, 1]} : vector<8x64xf32> to vector<1x64xf32>
    %5 = arith.extf %1 : vector<64x64xbf16> to vector<64x64xf32>
    %6 = vector.broadcast %4 : vector<1x64xf32> to vector<64x64xf32>
    %7 = arith.mulf %5, %6 : vector<64x64xf32>
    %8 = vector.extract_strided_slice %3 {offsets = [1, 0], sizes = [1, 64], strides = [1, 1]} : vector<8x64xf32> to vector<1x64xf32>
    %9 = vector.broadcast %8 : vector<1x64xf32> to vector<64x64xf32>
    %10 = arith.addf %7, %9 : vector<64x64xf32>
    %11 = arith.truncf %10 : vector<64x64xf32> to vector<64x64xbf16>
    %c0_5 = arith.constant 0 : index
    %c0_6 = arith.constant 0 : index
    %12 = vector.load %arg4[%c0_5, %c0_6] : memref<64x192xbf16, #tpu.memory_space<vmem>>, vector<64x192xbf16>
    %cst = arith.constant dense<0.000000e+00> : vector<64x192xf32>
    %13 = tpu.matmul %11, %12, %cst {dimension_numbers = #tpu.dot_dimension_numbers<[1], [0], [0], [1], [0, 0, 1, 1], [], []>} : vector<64x64xbf16>, vector<64x192xbf16>, vector<64x192xf32> -> vector<64x192xf32>
    %c0_7 = arith.constant 0 : index
    %c0_8 = arith.constant 0 : index
    %14 = vector.load %arg5[%c0_7, %c0_8] : memref<8x192xf32, #tpu.memory_space<vmem>>, vector<1x192xf32>
    %15 = vector.broadcast %14 : vector<1x192xf32> to vector<64x192xf32>
    %16 = arith.addf %13, %15 : vector<64x192xf32>
    %17 = vector.extract_strided_slice %16 {offsets = [0, 0], sizes = [64, 16], strides = [1, 1]} : vector<64x192xf32> to vector<64x16xf32>
    %18 = arith.truncf %17 : vector<64x16xf32> to vector<64x16xbf16>
    %c0_9 = arith.constant 0 : index
    %c0_10 = arith.constant 0 : index
    %c0_11 = arith.constant 0 : index
    %c0_12 = arith.constant 0 : index
    %19 = vector.load %arg6[%c0_9, %c0_10, %c0_11, %c0_12] : memref<1x4x64x16xbf16, #tpu.memory_space<vmem>>, vector<1x1x64x16xbf16>
    %20 = vector.shape_cast %19 : vector<1x1x64x16xbf16> to vector<64x16xbf16>
    %21 = vector.shape_cast %18 : vector<64x16xbf16> to vector<1x1x64x16xbf16>
    tpu.vector_store %arg6[%c0_9, %c0_10, %c0_11, %c0_12], %21 {strides = array<i32>} : memref<1x4x64x16xbf16, #tpu.memory_space<vmem>>, vector<1x1x64x16xbf16>,
    %22 = vector.extract_strided_slice %16 {offsets = [0, 64], sizes = [64, 16], strides = [1, 1]} : vector<64x192xf32> to vector<64x16xf32>
    %23 = arith.truncf %22 : vector<64x16xf32> to vector<64x16xbf16>
    %c0_13 = arith.constant 0 : index
    %c0_14 = arith.constant 0 : index
    %c0_15 = arith.constant 0 : index
    %c0_16 = arith.constant 0 : index
    %24 = vector.load %arg7[%c0_13, %c0_14, %c0_15, %c0_16] : memref<1x4x64x16xbf16, #tpu.memory_space<vmem>>, vector<1x1x64x16xbf16>
    %25 = vector.shape_cast %24 : vector<1x1x64x16xbf16> to vector<64x16xbf16>
    %26 = vector.shape_cast %23 : vector<64x16xbf16> to vector<1x1x64x16xbf16>
    tpu.vector_store %arg7[%c0_13, %c0_14, %c0_15, %c0_16], %26 {strides = array<i32>} : memref<1x4x64x16xbf16, #tpu.memory_space<vmem>>, vector<1x1x64x16xbf16>,
    %27 = vector.extract_strided_slice %16 {offsets = [0, 128], sizes = [64, 16], strides = [1, 1]} : vector<64x192xf32> to vector<64x16xf32>
    %28 = arith.truncf %27 : vector<64x16xf32> to vector<64x16xbf16>
    %c0_17 = arith.constant 0 : index
    %c0_18 = arith.constant 0 : index
    %c0_19 = arith.constant 0 : index
    %c0_20 = arith.constant 0 : index
    %29 = vector.load %arg8[%c0_17, %c0_18, %c0_19, %c0_20] : memref<1x4x64x16xbf16, #tpu.memory_space<vmem>>, vector<1x1x64x16xbf16>
    %30 = vector.shape_cast %29 : vector<1x1x64x16xbf16> to vector<64x16xbf16>
    %31 = vector.shape_cast %28 : vector<64x16xbf16> to vector<1x1x64x16xbf16>
    tpu.vector_store %arg8[%c0_17, %c0_18, %c0_19, %c0_20], %31 {strides = array<i32>} : memref<1x4x64x16xbf16, #tpu.memory_space<vmem>>, vector<1x1x64x16xbf16>,
    %32 = vector.extract_strided_slice %16 {offsets = [0, 16], sizes = [64, 16], strides = [1, 1]} : vector<64x192xf32> to vector<64x16xf32>
    %33 = arith.truncf %32 : vector<64x16xf32> to vector<64x16xbf16>
    %c0_21 = arith.constant 0 : index
    %c1 = arith.constant 1 : index
    %c0_22 = arith.constant 0 : index
    %c0_23 = arith.constant 0 : index
    %34 = vector.load %arg6[%c0_21, %c1, %c0_22, %c0_23] : memref<1x4x64x16xbf16, #tpu.memory_space<vmem>>, vector<1x1x64x16xbf16>
    %35 = vector.shape_cast %34 : vector<1x1x64x16xbf16> to vector<64x16xbf16>
    %36 = vector.shape_cast %33 : vector<64x16xbf16> to vector<1x1x64x16xbf16>
    tpu.vector_store %arg6[%c0_21, %c1, %c0_22, %c0_23], %36 {strides = array<i32>} : memref<1x4x64x16xbf16, #tpu.memory_space<vmem>>, vector<1x1x64x16xbf16>,
    %37 = vector.extract_strided_slice %16 {offsets = [0, 80], sizes = [64, 16], strides = [1, 1]} : vector<64x192xf32> to vector<64x16xf32>
    %38 = arith.truncf %37 : vector<64x16xf32> to vector<64x16xbf16>
    %c0_24 = arith.constant 0 : index
    %c1_25 = arith.constant 1 : index
    %c0_26 = arith.constant 0 : index
    %c0_27 = arith.constant 0 : index
    %39 = vector.load %arg7[%c0_24, %c1_25, %c0_26, %c0_27] : memref<1x4x64x16xbf16, #tpu.memory_space<vmem>>, vector<1x1x64x16xbf16>
    %40 = vector.shape_cast %39 : vector<1x1x64x16xbf16> to vector<64x16xbf16>
    %41 = vector.shape_cast %38 : vector<64x16xbf16> to vector<1x1x64x16xbf16>
    tpu.vector_store %arg7[%c0_24, %c1_25, %c0_26, %c0_27], %41 {strides = array<i32>} : memref<1x4x64x16xbf16, #tpu.memory_space<vmem>>, vector<1x1x64x16xbf16>,
    %42 = vector.extract_strided_slice %16 {offsets = [0, 144], sizes = [64, 16], strides = [1, 1]} : vector<64x192xf32> to vector<64x16xf32>
    %43 = arith.truncf %42 : vector<64x16xf32> to vector<64x16xbf16>
    %c0_28 = arith.constant 0 : index
    %c1_29 = arith.constant 1 : index
    %c0_30 = arith.constant 0 : index
    %c0_31 = arith.constant 0 : index
    %44 = vector.load %arg8[%c0_28, %c1_29, %c0_30, %c0_31] : memref<1x4x64x16xbf16, #tpu.memory_space<vmem>>, vector<1x1x64x16xbf16>
    %45 = vector.shape_cast %44 : vector<1x1x64x16xbf16> to vector<64x16xbf16>
    %46 = vector.shape_cast %43 : vector<64x16xbf16> to vector<1x1x64x16xbf16>
    tpu.vector_store %arg8[%c0_28, %c1_29, %c0_30, %c0_31], %46 {strides = array<i32>} : memref<1x4x64x16xbf16, #tpu.memory_space<vmem>>, vector<1x1x64x16xbf16>,
    %47 = vector.extract_strided_slice %16 {offsets = [0, 32], sizes = [64, 16], strides = [1, 1]} : vector<64x192xf32> to vector<64x16xf32>
    %48 = arith.truncf %47 : vector<64x16xf32> to vector<64x16xbf16>
    %c0_32 = arith.constant 0 : index
    %c2 = arith.constant 2 : index
    %c0_33 = arith.constant 0 : index
    %c0_34 = arith.constant 0 : index
    %49 = vector.load %arg6[%c0_32, %c2, %c0_33, %c0_34] : memref<1x4x64x16xbf16, #tpu.memory_space<vmem>>, vector<1x1x64x16xbf16>
    %50 = vector.shape_cast %49 : vector<1x1x64x16xbf16> to vector<64x16xbf16>
    %51 = vector.shape_cast %48 : vector<64x16xbf16> to vector<1x1x64x16xbf16>
    tpu.vector_store %arg6[%c0_32, %c2, %c0_33, %c0_34], %51 {strides = array<i32>} : memref<1x4x64x16xbf16, #tpu.memory_space<vmem>>, vector<1x1x64x16xbf16>,
    %52 = vector.extract_strided_slice %16 {offsets = [0, 96], sizes = [64, 16], strides = [1, 1]} : vector<64x192xf32> to vector<64x16xf32>
    %53 = arith.truncf %52 : vector<64x16xf32> to vector<64x16xbf16>
    %c0_35 = arith.constant 0 : index
    %c2_36 = arith.constant 2 : index
    %c0_37 = arith.constant 0 : index
    %c0_38 = arith.constant 0 : index
    %54 = vector.load %arg7[%c0_35, %c2_36, %c0_37, %c0_38] : memref<1x4x64x16xbf16, #tpu.memory_space<vmem>>, vector<1x1x64x16xbf16>
    %55 = vector.shape_cast %54 : vector<1x1x64x16xbf16> to vector<64x16xbf16>
    %56 = vector.shape_cast %53 : vector<64x16xbf16> to vector<1x1x64x16xbf16>
    tpu.vector_store %arg7[%c0_35, %c2_36, %c0_37, %c0_38], %56 {strides = array<i32>} : memref<1x4x64x16xbf16, #tpu.memory_space<vmem>>, vector<1x1x64x16xbf16>,
    %57 = vector.extract_strided_slice %16 {offsets = [0, 160], sizes = [64, 16], strides = [1, 1]} : vector<64x192xf32> to vector<64x16xf32>
    %58 = arith.truncf %57 : vector<64x16xf32> to vector<64x16xbf16>
    %c0_39 = arith.constant 0 : index
    %c2_40 = arith.constant 2 : index
    %c0_41 = arith.constant 0 : index
    %c0_42 = arith.constant 0 : index
    %59 = vector.load %arg8[%c0_39, %c2_40, %c0_41, %c0_42] : memref<1x4x64x16xbf16, #tpu.memory_space<vmem>>, vector<1x1x64x16xbf16>
    %60 = vector.shape_cast %59 : vector<1x1x64x16xbf16> to vector<64x16xbf16>
    %61 = vector.shape_cast %58 : vector<64x16xbf16> to vector<1x1x64x16xbf16>
    tpu.vector_store %arg8[%c0_39, %c2_40, %c0_41, %c0_42], %61 {strides = array<i32>} : memref<1x4x64x16xbf16, #tpu.memory_space<vmem>>, vector<1x1x64x16xbf16>,
    %62 = vector.extract_strided_slice %16 {offsets = [0, 48], sizes = [64, 16], strides = [1, 1]} : vector<64x192xf32> to vector<64x16xf32>
    %63 = arith.truncf %62 : vector<64x16xf32> to vector<64x16xbf16>
    %c0_43 = arith.constant 0 : index
    %c3 = arith.constant 3 : index
    %c0_44 = arith.constant 0 : index
    %c0_45 = arith.constant 0 : index
    %64 = vector.load %arg6[%c0_43, %c3, %c0_44, %c0_45] : memref<1x4x64x16xbf16, #tpu.memory_space<vmem>>, vector<1x1x64x16xbf16>
    %65 = vector.shape_cast %64 : vector<1x1x64x16xbf16> to vector<64x16xbf16>
    %66 = vector.shape_cast %63 : vector<64x16xbf16> to vector<1x1x64x16xbf16>
    tpu.vector_store %arg6[%c0_43, %c3, %c0_44, %c0_45], %66 {strides = array<i32>} : memref<1x4x64x16xbf16, #tpu.memory_space<vmem>>, vector<1x1x64x16xbf16>,
    %67 = vector.extract_strided_slice %16 {offsets = [0, 112], sizes = [64, 16], strides = [1, 1]} : vector<64x192xf32> to vector<64x16xf32>
    %68 = arith.truncf %67 : vector<64x16xf32> to vector<64x16xbf16>
    %c0_46 = arith.constant 0 : index
    %c3_47 = arith.constant 3 : index
    %c0_48 = arith.constant 0 : index
    %c0_49 = arith.constant 0 : index
    %69 = vector.load %arg7[%c0_46, %c3_47, %c0_48, %c0_49] : memref<1x4x64x16xbf16, #tpu.memory_space<vmem>>, vector<1x1x64x16xbf16>
    %70 = vector.shape_cast %69 : vector<1x1x64x16xbf16> to vector<64x16xbf16>
    %71 = vector.shape_cast %68 : vector<64x16xbf16> to vector<1x1x64x16xbf16>
    tpu.vector_store %arg7[%c0_46, %c3_47, %c0_48, %c0_49], %71 {strides = array<i32>} : memref<1x4x64x16xbf16, #tpu.memory_space<vmem>>, vector<1x1x64x16xbf16>,
    %72 = vector.extract_strided_slice %16 {offsets = [0, 176], sizes = [64, 16], strides = [1, 1]} : vector<64x192xf32> to vector<64x16xf32>
    %73 = arith.truncf %72 : vector<64x16xf32> to vector<64x16xbf16>
    %c0_50 = arith.constant 0 : index
    %c3_51 = arith.constant 3 : index
    %c0_52 = arith.constant 0 : index
    %c0_53 = arith.constant 0 : index
    %74 = vector.load %arg8[%c0_50, %c3_51, %c0_52, %c0_53] : memref<1x4x64x16xbf16, #tpu.memory_space<vmem>>, vector<1x1x64x16xbf16>
    %75 = vector.shape_cast %74 : vector<1x1x64x16xbf16> to vector<64x16xbf16>
    %76 = vector.shape_cast %73 : vector<64x16xbf16> to vector<1x1x64x16xbf16>
    tpu.vector_store %arg8[%c0_50, %c3_51, %c0_52, %c0_53], %76 {strides = array<i32>} : memref<1x4x64x16xbf16, #tpu.memory_space<vmem>>, vector<1x1x64x16xbf16>,
    return
  }
  func.func @transform_0(%arg0: i32, %arg1: i32) -> (i32, i32, i32) {
    %c0_i32 = arith.constant 0 : i32
    %c0_i32_0 = arith.constant 0 : i32
    return %arg0, %arg1, %c0_i32 : i32, i32, i32
  }
  func.func @transform_1(%arg0: i32, %arg1: i32) -> (i32, i32, i32) {
    %c0_i32 = arith.constant 0 : i32
    %c0_i32_0 = arith.constant 0 : i32
    %c0_i32_1 = arith.constant 0 : i32
    return %arg0, %c0_i32, %c0_i32_0 : i32, i32, i32
  }
  func.func @transform_2(%arg0: i32, %arg1: i32) -> (i32, i32) {
    %c0_i32 = arith.constant 0 : i32
    %c0_i32_0 = arith.constant 0 : i32
    %c0_i32_1 = arith.constant 0 : i32
    return %c0_i32, %c0_i32_0 : i32, i32
  }
  func.func @transform_3(%arg0: i32, %arg1: i32) -> (i32, i32) {
    %c0_i32 = arith.constant 0 : i32
    %c0_i32_0 = arith.constant 0 : i32
    %c0_i32_1 = arith.constant 0 : i32
    return %c0_i32, %c0_i32_0 : i32, i32
  }
  func.func @transform_4(%arg0: i32, %arg1: i32) -> (i32, i32, i32, i32) {
    %c0_i32 = arith.constant 0 : i32
    %c0_i32_0 = arith.constant 0 : i32
    %c0_i32_1 = arith.constant 0 : i32
    return %arg0, %c0_i32, %arg1, %c0_i32_0 : i32, i32, i32, i32
  }
  func.func @transform_5(%arg0: i32, %arg1: i32) -> (i32, i32, i32, i32) {
    %c0_i32 = arith.constant 0 : i32
    %c0_i32_0 = arith.constant 0 : i32
    %c0_i32_1 = arith.constant 0 : i32
    return %arg0, %c0_i32, %arg1, %c0_i32_0 : i32, i32, i32, i32
  }
  func.func @transform_6(%arg0: i32, %arg1: i32) -> (i32, i32, i32, i32) {
    %c0_i32 = arith.constant 0 : i32
    %c0_i32_0 = arith.constant 0 : i32
    %c0_i32_1 = arith.constant 0 : i32
    return %arg0, %c0_i32, %arg1, %c0_i32_0 : i32, i32, i32, i32
  }
}

module attributes {stable_mosaic.version = 11 : i64} {
  func.func @_qkv_self_kernel(%arg0: i32, %arg1: i32, %arg2: memref<1x64x64xbf16, #tpu.memory_space<vmem>>, %arg3: memref<1x8x64xf32, #tpu.memory_space<vmem>>, %arg4: memref<64x192xbf16, #tpu.memory_space<vmem>>, %arg5: memref<8x192xf32, #tpu.memory_space<vmem>>, %arg6: memref<1x4x64x16xbf16, #tpu.memory_space<vmem>>, %arg7: memref<1x4x64x16xbf16, #tpu.memory_space<vmem>>, %arg8: memref<1x4x64x16xbf16, #tpu.memory_space<vmem>>) attributes {dimension_semantics = [#tpu.dimension_semantics<parallel>, #tpu.dimension_semantics<parallel>], iteration_bounds = array<i64: 2, 1>, scalar_prefetch = 0 : i64, scratch_operands = 0 : i64, tpu.core_type = #tpu.core_type<tc>, window_params = [{transform_indices = @transform_0, window_bounds = array<i64: 1, 64, 64>}, {transform_indices = @transform_1, window_bounds = array<i64: 1, 8, 64>}, {pipeline_mode = #tpu.pipeline_mode<synchronous>, transform_indices = @transform_2, window_bounds = array<i64: 64, 192>}, {pipeline_mode = #tpu.pipeline_mode<synchronous>, transform_indices = @transform_3, window_bounds = array<i64: 8, 192>}, {transform_indices = @transform_4, window_bounds = array<i64: 1, 4, 64, 16>}, {transform_indices = @transform_5, window_bounds = array<i64: 1, 4, 64, 16>}, {transform_indices = @transform_6, window_bounds = array<i64: 1, 4, 64, 16>}]} {
    %c0 = arith.constant 0 : index
    %c0_0 = arith.constant 0 : index
    %c0_1 = arith.constant 0 : index
    %0 = vector.load %arg2[%c0, %c0_0, %c0_1] : memref<1x64x64xbf16, #tpu.memory_space<vmem>>, vector<1x64x64xbf16>
    %1 = vector.shape_cast %0 : vector<1x64x64xbf16> to vector<64x64xbf16>
    %c0_2 = arith.constant 0 : index
    %c0_3 = arith.constant 0 : index
    %c0_4 = arith.constant 0 : index
    %2 = vector.load %arg3[%c0_2, %c0_3, %c0_4] : memref<1x8x64xf32, #tpu.memory_space<vmem>>, vector<1x8x64xf32>
    %3 = vector.shape_cast %2 : vector<1x8x64xf32> to vector<8x64xf32>
    %4 = vector.extract_strided_slice %3 {offsets = [0, 0], sizes = [1, 64], strides = [1, 1]} : vector<8x64xf32> to vector<1x64xf32>
    %5 = arith.extf %1 : vector<64x64xbf16> to vector<64x64xf32>
    %6 = vector.broadcast %4 : vector<1x64xf32> to vector<64x64xf32>
    %7 = arith.mulf %5, %6 : vector<64x64xf32>
    %8 = vector.extract_strided_slice %3 {offsets = [1, 0], sizes = [1, 64], strides = [1, 1]} : vector<8x64xf32> to vector<1x64xf32>
    %9 = vector.broadcast %8 : vector<1x64xf32> to vector<64x64xf32>
    %10 = arith.addf %7, %9 : vector<64x64xf32>
    %11 = arith.truncf %10 : vector<64x64xf32> to vector<64x64xbf16>
    %c0_5 = arith.constant 0 : index
    %c0_6 = arith.constant 0 : index
    %12 = vector.load %arg4[%c0_5, %c0_6] : memref<64x192xbf16, #tpu.memory_space<vmem>>, vector<64x192xbf16>
    %cst = arith.constant dense<0.000000e+00> : vector<64x192xf32>
    %13 = tpu.matmul %11, %12, %cst {dimension_numbers = #tpu.dot_dimension_numbers<[1], [0], [0], [1], [0, 0, 1, 1], [], []>} : vector<64x64xbf16>, vector<64x192xbf16>, vector<64x192xf32> -> vector<64x192xf32>
    %c0_7 = arith.constant 0 : index
    %c0_8 = arith.constant 0 : index
    %14 = vector.load %arg5[%c0_7, %c0_8] : memref<8x192xf32, #tpu.memory_space<vmem>>, vector<1x192xf32>
    %15 = vector.broadcast %14 : vector<1x192xf32> to vector<64x192xf32>
    %16 = arith.addf %13, %15 : vector<64x192xf32>
    %17 = vector.extract_strided_slice %16 {offsets = [0, 0], sizes = [64, 16], strides = [1, 1]} : vector<64x192xf32> to vector<64x16xf32>
    %18 = arith.truncf %17 : vector<64x16xf32> to vector<64x16xbf16>
    %c0_9 = arith.constant 0 : index
    %c0_10 = arith.constant 0 : index
    %c0_11 = arith.constant 0 : index
    %c0_12 = arith.constant 0 : index
    %19 = vector.load %arg6[%c0_9, %c0_10, %c0_11, %c0_12] : memref<1x4x64x16xbf16, #tpu.memory_space<vmem>>, vector<1x1x64x16xbf16>
    %20 = vector.shape_cast %19 : vector<1x1x64x16xbf16> to vector<64x16xbf16>
    %21 = vector.shape_cast %18 : vector<64x16xbf16> to vector<1x1x64x16xbf16>
    tpu.vector_store %arg6[%c0_9, %c0_10, %c0_11, %c0_12], %21 {strides = array<i32>} : memref<1x4x64x16xbf16, #tpu.memory_space<vmem>>, vector<1x1x64x16xbf16>,
    %22 = vector.extract_strided_slice %16 {offsets = [0, 64], sizes = [64, 16], strides = [1, 1]} : vector<64x192xf32> to vector<64x16xf32>
    %23 = arith.truncf %22 : vector<64x16xf32> to vector<64x16xbf16>
    %c0_13 = arith.constant 0 : index
    %c0_14 = arith.constant 0 : index
    %c0_15 = arith.constant 0 : index
    %c0_16 = arith.constant 0 : index
    %24 = vector.load %arg7[%c0_13, %c0_14, %c0_15, %c0_16] : memref<1x4x64x16xbf16, #tpu.memory_space<vmem>>, vector<1x1x64x16xbf16>
    %25 = vector.shape_cast %24 : vector<1x1x64x16xbf16> to vector<64x16xbf16>
    %26 = vector.shape_cast %23 : vector<64x16xbf16> to vector<1x1x64x16xbf16>
    tpu.vector_store %arg7[%c0_13, %c0_14, %c0_15, %c0_16], %26 {strides = array<i32>} : memref<1x4x64x16xbf16, #tpu.memory_space<vmem>>, vector<1x1x64x16xbf16>,
    %27 = vector.extract_strided_slice %16 {offsets = [0, 128], sizes = [64, 16], strides = [1, 1]} : vector<64x192xf32> to vector<64x16xf32>
    %28 = arith.truncf %27 : vector<64x16xf32> to vector<64x16xbf16>
    %c0_17 = arith.constant 0 : index
    %c0_18 = arith.constant 0 : index
    %c0_19 = arith.constant 0 : index
    %c0_20 = arith.constant 0 : index
    %29 = vector.load %arg8[%c0_17, %c0_18, %c0_19, %c0_20] : memref<1x4x64x16xbf16, #tpu.memory_space<vmem>>, vector<1x1x64x16xbf16>
    %30 = vector.shape_cast %29 : vector<1x1x64x16xbf16> to vector<64x16xbf16>
    %31 = vector.shape_cast %28 : vector<64x16xbf16> to vector<1x1x64x16xbf16>
    tpu.vector_store %arg8[%c0_17, %c0_18, %c0_19, %c0_20], %31 {strides = array<i32>} : memref<1x4x64x16xbf16, #tpu.memory_space<vmem>>, vector<1x1x64x16xbf16>,
    %32 = vector.extract_strided_slice %16 {offsets = [0, 16], sizes = [64, 16], strides = [1, 1]} : vector<64x192xf32> to vector<64x16xf32>
    %33 = arith.truncf %32 : vector<64x16xf32> to vector<64x16xbf16>
    %c0_21 = arith.constant 0 : index
    %c1 = arith.constant 1 : index
    %c0_22 = arith.constant 0 : index
    %c0_23 = arith.constant 0 : index
    %34 = vector.load %arg6[%c0_21, %c1, %c0_22, %c0_23] : memref<1x4x64x16xbf16, #tpu.memory_space<vmem>>, vector<1x1x64x16xbf16>
    %35 = vector.shape_cast %34 : vector<1x1x64x16xbf16> to vector<64x16xbf16>
    %36 = vector.shape_cast %33 : vector<64x16xbf16> to vector<1x1x64x16xbf16>
    tpu.vector_store %arg6[%c0_21, %c1, %c0_22, %c0_23], %36 {strides = array<i32>} : memref<1x4x64x16xbf16, #tpu.memory_space<vmem>>, vector<1x1x64x16xbf16>,
    %37 = vector.extract_strided_slice %16 {offsets = [0, 80], sizes = [64, 16], strides = [1, 1]} : vector<64x192xf32> to vector<64x16xf32>
    %38 = arith.truncf %37 : vector<64x16xf32> to vector<64x16xbf16>
    %c0_24 = arith.constant 0 : index
    %c1_25 = arith.constant 1 : index
    %c0_26 = arith.constant 0 : index
    %c0_27 = arith.constant 0 : index
    %39 = vector.load %arg7[%c0_24, %c1_25, %c0_26, %c0_27] : memref<1x4x64x16xbf16, #tpu.memory_space<vmem>>, vector<1x1x64x16xbf16>
    %40 = vector.shape_cast %39 : vector<1x1x64x16xbf16> to vector<64x16xbf16>
    %41 = vector.shape_cast %38 : vector<64x16xbf16> to vector<1x1x64x16xbf16>
    tpu.vector_store %arg7[%c0_24, %c1_25, %c0_26, %c0_27], %41 {strides = array<i32>} : memref<1x4x64x16xbf16, #tpu.memory_space<vmem>>, vector<1x1x64x16xbf16>,
    %42 = vector.extract_strided_slice %16 {offsets = [0, 144], sizes = [64, 16], strides = [1, 1]} : vector<64x192xf32> to vector<64x16xf32>
    %43 = arith.truncf %42 : vector<64x16xf32> to vector<64x16xbf16>
    %c0_28 = arith.constant 0 : index
    %c1_29 = arith.constant 1 : index
    %c0_30 = arith.constant 0 : index
    %c0_31 = arith.constant 0 : index
    %44 = vector.load %arg8[%c0_28, %c1_29, %c0_30, %c0_31] : memref<1x4x64x16xbf16, #tpu.memory_space<vmem>>, vector<1x1x64x16xbf16>
    %45 = vector.shape_cast %44 : vector<1x1x64x16xbf16> to vector<64x16xbf16>
    %46 = vector.shape_cast %43 : vector<64x16xbf16> to vector<1x1x64x16xbf16>
    tpu.vector_store %arg8[%c0_28, %c1_29, %c0_30, %c0_31], %46 {strides = array<i32>} : memref<1x4x64x16xbf16, #tpu.memory_space<vmem>>, vector<1x1x64x16xbf16>,
    %47 = vector.extract_strided_slice %16 {offsets = [0, 32], sizes = [64, 16], strides = [1, 1]} : vector<64x192xf32> to vector<64x16xf32>
    %48 = arith.truncf %47 : vector<64x16xf32> to vector<64x16xbf16>
    %c0_32 = arith.constant 0 : index
    %c2 = arith.constant 2 : index
    %c0_33 = arith.constant 0 : index
    %c0_34 = arith.constant 0 : index
    %49 = vector.load %arg6[%c0_32, %c2, %c0_33, %c0_34] : memref<1x4x64x16xbf16, #tpu.memory_space<vmem>>, vector<1x1x64x16xbf16>
    %50 = vector.shape_cast %49 : vector<1x1x64x16xbf16> to vector<64x16xbf16>
    %51 = vector.shape_cast %48 : vector<64x16xbf16> to vector<1x1x64x16xbf16>
    tpu.vector_store %arg6[%c0_32, %c2, %c0_33, %c0_34], %51 {strides = array<i32>} : memref<1x4x64x16xbf16, #tpu.memory_space<vmem>>, vector<1x1x64x16xbf16>,
    %52 = vector.extract_strided_slice %16 {offsets = [0, 96], sizes = [64, 16], strides = [1, 1]} : vector<64x192xf32> to vector<64x16xf32>
    %53 = arith.truncf %52 : vector<64x16xf32> to vector<64x16xbf16>
    %c0_35 = arith.constant 0 : index
    %c2_36 = arith.constant 2 : index
    %c0_37 = arith.constant 0 : index
    %c0_38 = arith.constant 0 : index
    %54 = vector.load %arg7[%c0_35, %c2_36, %c0_37, %c0_38] : memref<1x4x64x16xbf16, #tpu.memory_space<vmem>>, vector<1x1x64x16xbf16>
    %55 = vector.shape_cast %54 : vector<1x1x64x16xbf16> to vector<64x16xbf16>
    %56 = vector.shape_cast %53 : vector<64x16xbf16> to vector<1x1x64x16xbf16>
    tpu.vector_store %arg7[%c0_35, %c2_36, %c0_37, %c0_38], %56 {strides = array<i32>} : memref<1x4x64x16xbf16, #tpu.memory_space<vmem>>, vector<1x1x64x16xbf16>,
    %57 = vector.extract_strided_slice %16 {offsets = [0, 160], sizes = [64, 16], strides = [1, 1]} : vector<64x192xf32> to vector<64x16xf32>
    %58 = arith.truncf %57 : vector<64x16xf32> to vector<64x16xbf16>
    %c0_39 = arith.constant 0 : index
    %c2_40 = arith.constant 2 : index
    %c0_41 = arith.constant 0 : index
    %c0_42 = arith.constant 0 : index
    %59 = vector.load %arg8[%c0_39, %c2_40, %c0_41, %c0_42] : memref<1x4x64x16xbf16, #tpu.memory_space<vmem>>, vector<1x1x64x16xbf16>
    %60 = vector.shape_cast %59 : vector<1x1x64x16xbf16> to vector<64x16xbf16>
    %61 = vector.shape_cast %58 : vector<64x16xbf16> to vector<1x1x64x16xbf16>
    tpu.vector_store %arg8[%c0_39, %c2_40, %c0_41, %c0_42], %61 {strides = array<i32>} : memref<1x4x64x16xbf16, #tpu.memory_space<vmem>>, vector<1x1x64x16xbf16>,
    %62 = vector.extract_strided_slice %16 {offsets = [0, 48], sizes = [64, 16], strides = [1, 1]} : vector<64x192xf32> to vector<64x16xf32>
    %63 = arith.truncf %62 : vector<64x16xf32> to vector<64x16xbf16>
    %c0_43 = arith.constant 0 : index
    %c3 = arith.constant 3 : index
    %c0_44 = arith.constant 0 : index
    %c0_45 = arith.constant 0 : index
    %64 = vector.load %arg6[%c0_43, %c3, %c0_44, %c0_45] : memref<1x4x64x16xbf16, #tpu.memory_space<vmem>>, vector<1x1x64x16xbf16>
    %65 = vector.shape_cast %64 : vector<1x1x64x16xbf16> to vector<64x16xbf16>
    %66 = vector.shape_cast %63 : vector<64x16xbf16> to vector<1x1x64x16xbf16>
    tpu.vector_store %arg6[%c0_43, %c3, %c0_44, %c0_45], %66 {strides = array<i32>} : memref<1x4x64x16xbf16, #tpu.memory_space<vmem>>, vector<1x1x64x16xbf16>,
    %67 = vector.extract_strided_slice %16 {offsets = [0, 112], sizes = [64, 16], strides = [1, 1]} : vector<64x192xf32> to vector<64x16xf32>
    %68 = arith.truncf %67 : vector<64x16xf32> to vector<64x16xbf16>
    %c0_46 = arith.constant 0 : index
    %c3_47 = arith.constant 3 : index
    %c0_48 = arith.constant 0 : index
    %c0_49 = arith.constant 0 : index
    %69 = vector.load %arg7[%c0_46, %c3_47, %c0_48, %c0_49] : memref<1x4x64x16xbf16, #tpu.memory_space<vmem>>, vector<1x1x64x16xbf16>
    %70 = vector.shape_cast %69 : vector<1x1x64x16xbf16> to vector<64x16xbf16>
    %71 = vector.shape_cast %68 : vector<64x16xbf16> to vector<1x1x64x16xbf16>
    tpu.vector_store %arg7[%c0_46, %c3_47, %c0_48, %c0_49], %71 {strides = array<i32>} : memref<1x4x64x16xbf16, #tpu.memory_space<vmem>>, vector<1x1x64x16xbf16>,
    %72 = vector.extract_strided_slice %16 {offsets = [0, 176], sizes = [64, 16], strides = [1, 1]} : vector<64x192xf32> to vector<64x16xf32>
    %73 = arith.truncf %72 : vector<64x16xf32> to vector<64x16xbf16>
    %c0_50 = arith.constant 0 : index
    %c3_51 = arith.constant 3 : index
    %c0_52 = arith.constant 0 : index
    %c0_53 = arith.constant 0 : index
    %74 = vector.load %arg8[%c0_50, %c3_51, %c0_52, %c0_53] : memref<1x4x64x16xbf16, #tpu.memory_space<vmem>>, vector<1x1x64x16xbf16>
    %75 = vector.shape_cast %74 : vector<1x1x64x16xbf16> to vector<64x16xbf16>
    %76 = vector.shape_cast %73 : vector<64x16xbf16> to vector<1x1x64x16xbf16>
    tpu.vector_store %arg8[%c0_50, %c3_51, %c0_52, %c0_53], %76 {strides = array<i32>} : memref<1x4x64x16xbf16, #tpu.memory_space<vmem>>, vector<1x1x64x16xbf16>,
    return
  }
  func.func @transform_0(%arg0: i32, %arg1: i32) -> (i32, i32, i32) {
    %c0_i32 = arith.constant 0 : i32
    %c0_i32_0 = arith.constant 0 : i32
    return %arg0, %arg1, %c0_i32 : i32, i32, i32
  }
  func.func @transform_1(%arg0: i32, %arg1: i32) -> (i32, i32, i32) {
    %c0_i32 = arith.constant 0 : i32
    %c0_i32_0 = arith.constant 0 : i32
    %c0_i32_1 = arith.constant 0 : i32
    return %arg0, %c0_i32, %c0_i32_0 : i32, i32, i32
  }
  func.func @transform_2(%arg0: i32, %arg1: i32) -> (i32, i32) {
    %c0_i32 = arith.constant 0 : i32
    %c0_i32_0 = arith.constant 0 : i32
    %c0_i32_1 = arith.constant 0 : i32
    return %c0_i32, %c0_i32_0 : i32, i32
  }
  func.func @transform_3(%arg0: i32, %arg1: i32) -> (i32, i32) {
    %c0_i32 = arith.constant 0 : i32
    %c0_i32_0 = arith.constant 0 : i32
    %c0_i32_1 = arith.constant 0 : i32
    return %c0_i32, %c0_i32_0 : i32, i32
  }
  func.func @transform_4(%arg0: i32, %arg1: i32) -> (i32, i32, i32, i32) {
    %c0_i32 = arith.constant 0 : i32
    %c0_i32_0 = arith.constant 0 : i32
    %c0_i32_1 = arith.constant 0 : i32
    return %arg0, %c0_i32, %arg1, %c0_i32_0 : i32, i32, i32, i32
  }
  func.func @transform_5(%arg0: i32, %arg1: i32) -> (i32, i32, i32, i32) {
    %c0_i32 = arith.constant 0 : i32
    %c0_i32_0 = arith.constant 0 : i32
    %c0_i32_1 = arith.constant 0 : i32
    return %arg0, %c0_i32, %arg1, %c0_i32_0 : i32, i32, i32, i32
  }
  func.func @transform_6(%arg0: i32, %arg1: i32) -> (i32, i32, i32, i32) {
    %c0_i32 = arith.constant 0 : i32
    %c0_i32_0 = arith.constant 0 : i32
    %c0_i32_1 = arith.constant 0 : i32
    return %arg0, %c0_i32, %arg1, %c0_i32_0 : i32, i32, i32, i32
  }
}

</mosaic_0001>

<llo_original>
// kernel: tpu_custom_call.1
$region0: #{tpu_custom_call.1}
  #allocation0 [shape = 'u32[]', space=smem, size = 0x4, offset = 0x4, fixed_abs, tag = 'smem constant byte address 0x4 - core index']
  #allocation1 [shape = 'u32[144,128]{1,0:T(1,128)}', space=vmem, size = 0x12000, scoped, tag = 'internal scratch']
  %s0 = inlined_call_operand.hbm [shape: bf16[2,64,64], index: 0, kind: input, shape index: {}]
  %s1 = inlined_call_operand.hbm [shape: f32[2,8,64], index: 1, kind: input, shape index: {}]
  %s2 = inlined_call_operand.hbm [shape: bf16[64,192], index: 2, kind: input, shape index: {}]
  %s3 = inlined_call_operand.hbm [shape: f32[8,192], index: 3, kind: input, shape index: {}]
  %s4 = inlined_call_operand.vmem [shape: bf16[2,4,64,16], index: 4, kind: output, shape index: {0}]
  %s5 = inlined_call_operand.vmem [shape: bf16[2,4,64,16], index: 5, kind: output, shape index: {1}]
  %s6 = inlined_call_operand.vmem [shape: bf16[2,4,64,16], index: 6, kind: output, shape index: {2}]
  %7 = xla_tuple %s4, %s5, %s6
  %s8 = sld [smem:[#allocation0]]
  $region81: #{tpu_custom_call.1} parent=0
    _
  %s10 = ssub.s32 1, %s8
  %s11 = scalar_select 0, %s10, %s8
  $region1: #{tpu_custom_call.1} parent=0
    #allocation2 [shape = 'u8[32768]{0}', space=vmem, size = 0x8000, scoped, tag = 'input window, operand 0']
    #allocation3 [shape = 's32[2]{0}', space=sflag, size = 0x8, scoped, tag = 'scoped memory for tpu_custom_call.1']
    #allocation4 [shape = 'u8[8192]{0}', space=vmem, size = 0x2000, scoped, tag = 'input window, operand 1']
    #allocation5 [shape = 's32[2]{0}', space=sflag, size = 0x8, scoped, tag = 'scoped memory for tpu_custom_call.1']
    #allocation6 [shape = 'u8[32768]{0}', space=vmem, size = 0x8000, scoped, tag = 'input window, operand 2, single buffered']
    #allocation7 [shape = 'u8[8192]{0}', space=vmem, size = 0x2000, scoped, tag = 'input window, operand 3, single buffered']
    #allocation8 [shape = 's32[1]{0}', space=sflag, size = 0x4, scoped, tag = 'scoped memory for tpu_custom_call.1']
    %12 = vsyncpa [#allocation3], 0
    %s13 = scalar_lea.sflag [#allocation3], 1
    %14 = vsyncpa %s13, 0
    %15 = vsyncpa [#allocation5], 0
    %s16 = scalar_lea.sflag [#allocation5], 1
    %17 = vsyncpa %s16, 0
    %18 = vsyncpa [#allocation8], 0
    loop: start=0, step=1, limit=4
    $region2: #{tpu_custom_call.1} parent=1 // loop_pre_header
      _
    $region3: #{tpu_custom_call.1} parent=1 // loop_header
      %s20 = sphi 0, %s24
      %p21 = scmp.ge.s32.totalorder %s20, 4
      %s27 = sphi 0, %s39
      %s28 = sphi 0, %s35
      %s29 = sphi 0, %s27
      %s30 = sphi 0, %s28
      %s31 = sphi 0, %s29
      %s32 = sphi 0, %s30
      %s44 = sphi 0, %s46
      %s47 = sphi 0, %s44
      %s48 = sphi 0, %s47
      %s64 = sphi 0, %s48
      %s70 = sphi 0, %s72
      %s73 = sphi 0, %s70
      %s74 = sphi 0, %s73
      %s90 = sphi 0, %s74
      %s94 = sphi 0, %s94
      %s96 = sphi 0, %s94
      %s97 = sphi 0, %s96
      %s111 = sphi 0, %s97
      %s115 = sphi 0, %s115
      %s117 = sphi 0, %s115
      %s118 = sphi 0, %s117
      %s132 = sphi 0, %s118
      %s140 = sphi 0, %s142
      %s143 = sphi 0, %s140
      %s144 = sphi 0, %s143
      %s160 = sphi 0, %s144
      %s168 = sphi 0, %s170
      %s171 = sphi 0, %s168
      %s172 = sphi 0, %s171
      %s188 = sphi 0, %s172
      %s196 = sphi 0, %s198
      %s199 = sphi 0, %s196
      %s200 = sphi 0, %s199
      %s216 = sphi 0, %s200
    $region4: #{tpu_custom_call.1} parent=1 // loop_header_branch
      %23 = sbr.rel (%p21) target = $region8
    $region5: #{tpu_custom_call.1} parent=1 // loop_body
      %s25 = ssub.s32 %s20, 1
      %s26 = ssub.s32 %s20, 2
      %s33 = sadd.s32 1, %s28
      %p34 = scmp.ge.s32.totalorder %s33, 1
      %s35 = scalar_select %p34, 0, %s33
      %s36 = sadd.s32 1, %s27
      %s37 = scalar_select %p34, %s36, %s27
      %p38 = scmp.ge.s32.totalorder %s37, 2
      %s39 = scalar_select %p38, 0, %s37
      %s40 = ssub.s32 %s27, %s39
      %s41 = ssub.s32 %s28, %s35
      %s42 = sor.u32 %s40, %s41
      %p43 = scmp.eq.s32.totalorder %s42, 0
      %s45 = sadd.s32 %s44, 1
      %s46 = scalar_select %p43, %s44, %s45
      %p49 = pneg %p43
      %p50 = scmp.eq.s32.totalorder %s20, 1
      %p51 = por %p49, %p50
      %p52 = scmp.ne.s32.totalorder %s44, %s47
      %p53 = scmp.eq.s32.totalorder %s20, 0
      %p54 = por %p52, %p53
      %p55 = scmp.ne.s32.totalorder %s44, %s47
      %p56 = scmp.eq.s32.totalorder %s25, 1
      %p57 = por %p55, %p56
      %p58 = scmp.ne.s32.totalorder %s47, %s48
      %p59 = scmp.eq.s32.totalorder %s25, 0
      %p60 = por %p58, %p59
      %p61 = scmp.ne.s32.totalorder %s47, %s48
      %p62 = scmp.eq.s32.totalorder %s26, 1
      %p63 = por %p61, %p62
      %p65 = scmp.ne.s32.totalorder %s48, %s64
      %p66 = scmp.eq.s32.totalorder %s26, 0
      %p67 = por %p65, %p66
      %s68 = ssub.s32 %s27, %s39
      %p69 = scmp.eq.s32.totalorder %s68, 0
      %s71 = sadd.s32 %s70, 1
      %s72 = scalar_select %p69, %s70, %s71
      %p75 = pneg %p69
      %p76 = scmp.eq.s32.totalorder %s20, 1
      %p77 = por %p75, %p76
      %p78 = scmp.ne.s32.totalorder %s70, %s73
      %p79 = scmp.eq.s32.totalorder %s20, 0
      %p80 = por %p78, %p79
      %p81 = scmp.ne.s32.totalorder %s70, %s73
      %p82 = scmp.eq.s32.totalorder %s25, 1
      %p83 = por %p81, %p82
      %p84 = scmp.ne.s32.totalorder %s73, %s74
      %p85 = scmp.eq.s32.totalorder %s25, 0
      %p86 = por %p84, %p85
      %p87 = scmp.ne.s32.totalorder %s73, %s74
      %p88 = scmp.eq.s32.totalorder %s26, 1
      %p89 = por %p87, %p88
      %p91 = scmp.ne.s32.totalorder %s74, %s90
      %p92 = scmp.eq.s32.totalorder %s26, 0
      %p93 = por %p91, %p92
      %s95 = sadd.s32 %s94, 1
      %p98 = scmp.eq.s32.totalorder %s20, 1
      %p99 = scmp.ne.s32.totalorder %s94, %s96
      %p100 = scmp.eq.s32.totalorder %s20, 0
      %p101 = por %p99, %p100
      %p102 = scmp.ne.s32.totalorder %s94, %s96
      %p103 = scmp.eq.s32.totalorder %s25, 1
      %p104 = por %p102, %p103
      %p105 = scmp.ne.s32.totalorder %s96, %s97
      %p106 = scmp.eq.s32.totalorder %s25, 0
      %p107 = por %p105, %p106
      %p108 = scmp.ne.s32.totalorder %s96, %s97
      %p109 = scmp.eq.s32.totalorder %s26, 1
      %p110 = por %p108, %p109
      %p112 = scmp.ne.s32.totalorder %s97, %s111
      %p113 = scmp.eq.s32.totalorder %s26, 0
      %p114 = por %p112, %p113
      %s116 = sadd.s32 %s115, 1
      %p119 = scmp.eq.s32.totalorder %s20, 1
      %p120 = scmp.ne.s32.totalorder %s115, %s117
      %p121 = scmp.eq.s32.totalorder %s20, 0
      %p122 = por %p120, %p121
      %p123 = scmp.ne.s32.totalorder %s115, %s117
      %p124 = scmp.eq.s32.totalorder %s25, 1
      %p125 = por %p123, %p124
      %p126 = scmp.ne.s32.totalorder %s117, %s118
      %p127 = scmp.eq.s32.totalorder %s25, 0
      %p128 = por %p126, %p127
      %p129 = scmp.ne.s32.totalorder %s117, %s118
      %p130 = scmp.eq.s32.totalorder %s26, 1
      %p131 = por %p129, %p130
      %p133 = scmp.ne.s32.totalorder %s118, %s132
      %p134 = scmp.eq.s32.totalorder %s26, 0
      %p135 = por %p133, %p134
      %s136 = ssub.s32 %s27, %s39
      %s137 = ssub.s32 %s28, %s35
      %s138 = sor.u32 %s136, %s137
      %p139 = scmp.eq.s32.totalorder %s138, 0
      %s141 = sadd.s32 %s140, 1
      %s142 = scalar_select %p139, %s140, %s141
      %p145 = pneg %p139
      %p146 = scmp.eq.s32.totalorder %s20, 1
      %p147 = por %p145, %p146
      %p148 = scmp.ne.s32.totalorder %s140, %s143
      %p149 = scmp.eq.s32.totalorder %s20, 0
      %p150 = por %p148, %p149
      %p151 = scmp.ne.s32.totalorder %s140, %s143
      %p152 = scmp.eq.s32.totalorder %s25, 1
      %p153 = por %p151, %p152
      %p154 = scmp.ne.s32.totalorder %s143, %s144
      %p155 = scmp.eq.s32.totalorder %s25, 0
      %p156 = por %p154, %p155
      %p157 = scmp.ne.s32.totalorder %s143, %s144
      %p158 = scmp.eq.s32.totalorder %s26, 1
      %p159 = por %p157, %p158
      %p161 = scmp.ne.s32.totalorder %s144, %s160
      %p162 = scmp.eq.s32.totalorder %s26, 0
      %p163 = por %p161, %p162
      %s164 = ssub.s32 %s27, %s39
      %s165 = ssub.s32 %s28, %s35
      %s166 = sor.u32 %s164, %s165
      %p167 = scmp.eq.s32.totalorder %s166, 0
      %s169 = sadd.s32 %s168, 1
      %s170 = scalar_select %p167, %s168, %s169
      %p173 = pneg %p167
      %p174 = scmp.eq.s32.totalorder %s20, 1
      %p175 = por %p173, %p174
      %p176 = scmp.ne.s32.totalorder %s168, %s171
      %p177 = scmp.eq.s32.totalorder %s20, 0
      %p178 = por %p176, %p177
      %p179 = scmp.ne.s32.totalorder %s168, %s171
      %p180 = scmp.eq.s32.totalorder %s25, 1
      %p181 = por %p179, %p180
      %p182 = scmp.ne.s32.totalorder %s171, %s172
      %p183 = scmp.eq.s32.totalorder %s25, 0
      %p184 = por %p182, %p183
      %p185 = scmp.ne.s32.totalorder %s171, %s172
      %p186 = scmp.eq.s32.totalorder %s26, 1
      %p187 = por %p185, %p186
      %p189 = scmp.ne.s32.totalorder %s172, %s188
      %p190 = scmp.eq.s32.totalorder %s26, 0
      %p191 = por %p189, %p190
      %s192 = ssub.s32 %s27, %s39
      %s193 = ssub.s32 %s28, %s35
      %s194 = sor.u32 %s192, %s193
      %p195 = scmp.eq.s32.totalorder %s194, 0
      %s197 = sadd.s32 %s196, 1
      %s198 = scalar_select %p195, %s196, %s197
      %p201 = pneg %p195
      %p202 = scmp.eq.s32.totalorder %s20, 1
      %p203 = por %p201, %p202
      %p204 = scmp.ne.s32.totalorder %s196, %s199
      %p205 = scmp.eq.s32.totalorder %s20, 0
      %p206 = por %p204, %p205
      %p207 = scmp.ne.s32.totalorder %s196, %s199
      %p208 = scmp.eq.s32.totalorder %s25, 1
      %p209 = por %p207, %p208
      %p210 = scmp.ne.s32.totalorder %s199, %s200
      %p211 = scmp.eq.s32.totalorder %s25, 0
      %p212 = por %p210, %p211
      %p213 = scmp.ne.s32.totalorder %s199, %s200
      %p214 = scmp.eq.s32.totalorder %s26, 1
      %p215 = por %p213, %p214
      %p217 = scmp.ne.s32.totalorder %s200, %s216
      %p218 = scmp.eq.s32.totalorder %s26, 0
      %p219 = por %p217, %p218
      %p220 = scmp.le.s32.totalorder 1, %s20
      %p221 = scmp.lt.s32.totalorder %s20, 3
      %p222 = pnand %p220, %p221
      %p223 = pneg %p222
      // Predicated region
      $region9: #{tpu_custom_call.1} parent=5 // pred_check
        _
      $region10: #{tpu_custom_call.1} parent=5 // pred_check_branch
        %225 = sbr.rel (%p222) target = $region12
      $region11: #{tpu_custom_call.1} parent=5 // pred_region
        %s226 = ssub.s32 %s20, 1
        // Predicated region
        $region13: #{tpu_custom_call.1} parent=11 // pred_check
          %p227 = pneg %p107
        $region14: #{tpu_custom_call.1} parent=11 // pred_check_branch
          %229 = sbr.rel (%p227) target = $region16
        $region15: #{tpu_custom_call.1} parent=11 // pred_region
          %s231 = ssub.s32 1024, 1024
          %232 = vsyncadd [#allocation5], %s231
          %s233 = sshll.u32 [#allocation6], 4
          %s234 = int_to_ptr.vmem [resolvable:$true] %s233
          %239 = dma.hbm_to_vmem [thread:$0]  %s2, 1024, %s234, [#allocation5], 128, 128, 8
        $region16: #{tpu_custom_call.1} parent=11 // pred_fallthru
          _
        // Predicated region
        $region17: #{tpu_custom_call.1} parent=11 // pred_check
          %p240 = pneg %p128
        $region18: #{tpu_custom_call.1} parent=11 // pred_check_branch
          %242 = sbr.rel (%p240) target = $region20
        $region19: #{tpu_custom_call.1} parent=11 // pred_region
          %s244 = ssub.s32 256, 256
          %245 = vsyncadd [#allocation8], %s244
          %s247 = sshll.u32 [#allocation7], 4
          %s248 = int_to_ptr.vmem [resolvable:$true] %s247
          %250 = dma.hbm_to_vmem [thread:$0]  %s3, 256, %s248, [#allocation8]
        $region20: #{tpu_custom_call.1} parent=11 // pred_fallthru
          _
      $region12: #{tpu_custom_call.1} parent=5 // pred_fallthru
        _
      %p251 = scmp.lt.s32.totalorder %s20, 2
      // Predicated region
      $region21: #{tpu_custom_call.1} parent=5 // pred_check
        %p252 = pneg %p251
      $region22: #{tpu_custom_call.1} parent=5 // pred_check_branch
        %254 = sbr.rel (%p252) target = $region24
      $region23: #{tpu_custom_call.1} parent=5 // pred_region
        // Predicated region
        $region25: #{tpu_custom_call.1} parent=23 // pred_check
          %p255 = pneg %p54
        $region26: #{tpu_custom_call.1} parent=23 // pred_check_branch
          %257 = sbr.rel (%p255) target = $region28
        $region27: #{tpu_custom_call.1} parent=23 // pred_region
          %s258 = sand.u32 %s44, 1
          %s259 = scalar_lea.sflag [#allocation3], %s258
          %s260 = sand.u32 %s44, 1
          %s261 = smul.addr %s260, 32
          %s262 = scalar_lea.vmem [#allocation2], %s261
          %s263 = smul.u32 8, %s28
          %s265 = ssub.s32 512, 512
          %266 = vsyncadd %s259, %s265
          %s267 = smul.addr %s27, 8
          %s268 = sadd.s32 %s263, %s267
          %s269 = smul.addr %s268, 64
          %s270 = scalar_lea.hbm %s0, %s269
          %s271 = sshll.u32 %s262, 4
          %s272 = int_to_ptr.vmem [resolvable:$true] %s271
          %277 = dma.hbm_to_vmem [thread:$0]  %s270, 512, %s272, %s259, 64, 64, 4
        $region28: #{tpu_custom_call.1} parent=23 // pred_fallthru
          _
        // Predicated region
        $region29: #{tpu_custom_call.1} parent=23 // pred_check
          %p278 = pneg %p80
        $region30: #{tpu_custom_call.1} parent=23 // pred_check_branch
          %280 = sbr.rel (%p278) target = $region32
        $region31: #{tpu_custom_call.1} parent=23 // pred_region
          %s281 = sand.u32 %s20, 1
          %s282 = scalar_lea.sflag [#allocation5], %s281
          %s283 = sand.u32 %s70, 1
          %s284 = smul.addr %s283, 8
          %s285 = scalar_lea.vmem [#allocation4], %s284
          %s287 = ssub.s32 128, 128
          %288 = vsyncadd %s282, %s287
          %s289 = smul.addr %s27, 128
          %s290 = scalar_lea.hbm %s1, %s289
          %s292 = sshll.u32 %s285, 4
          %s293 = int_to_ptr.vmem [resolvable:$true] %s292
          %295 = dma.hbm_to_vmem [thread:$0]  %s290, 128, %s293, %s282
        $region32: #{tpu_custom_call.1} parent=23 // pred_fallthru
          _
      $region24: #{tpu_custom_call.1} parent=5 // pred_fallthru
        _
      %p296 = scmp.le.s32.totalorder 1, %s20
      %p297 = scmp.lt.s32.totalorder %s20, 3
      %p298 = pnand %p296, %p297
      %p299 = pneg %p298
      // Predicated region
      $region33: #{tpu_custom_call.1} parent=5 // pred_check
        _
      $region34: #{tpu_custom_call.1} parent=5 // pred_check_branch
        %301 = sbr.rel (%p298) target = $region36
      $region35: #{tpu_custom_call.1} parent=5 // pred_region
        %s302 = ssub.s32 %s20, 1
        %s303 = sand.u32 %s47, 1
        %s304 = scalar_lea.sflag [#allocation3], %s303
        %s305 = sand.u32 %s47, 1
        %s306 = smul.addr %s305, 32
        %s307 = scalar_lea.vmem [#allocation2], %s306
        // Predicated region
        $region37: #{tpu_custom_call.1} parent=35 // pred_check
          %p308 = pneg %p60
        $region38: #{tpu_custom_call.1} parent=35 // pred_check_branch
          %310 = sbr.rel (%p308) target = $region40
        $region39: #{tpu_custom_call.1} parent=35 // pred_region
          %311 = dma.done %s304, 512
        $region40: #{tpu_custom_call.1} parent=35 // pred_fallthru
          _
        %s312 = sand.u32 %s25, 1
        %s313 = scalar_lea.sflag [#allocation5], %s312
        %s314 = sand.u32 %s73, 1
        %s315 = smul.addr %s314, 8
        %s316 = scalar_lea.vmem [#allocation4], %s315
        // Predicated region
        $region41: #{tpu_custom_call.1} parent=35 // pred_check
          %p317 = pneg %p86
        $region42: #{tpu_custom_call.1} parent=35 // pred_check_branch
          %319 = sbr.rel (%p317) target = $region44
        $region43: #{tpu_custom_call.1} parent=35 // pred_region
          %320 = dma.done %s313, 128
        $region44: #{tpu_custom_call.1} parent=35 // pred_fallthru
          _
        // Predicated region
        $region45: #{tpu_custom_call.1} parent=35 // pred_check
          %p321 = pneg %p107
        $region46: #{tpu_custom_call.1} parent=35 // pred_check_branch
          %323 = sbr.rel (%p321) target = $region48
        $region47: #{tpu_custom_call.1} parent=35 // pred_region
          %324 = dma.done [#allocation5], 1024
        $region48: #{tpu_custom_call.1} parent=35 // pred_fallthru
          _
        // Predicated region
        $region49: #{tpu_custom_call.1} parent=35 // pred_check
          %p325 = pneg %p128
        $region50: #{tpu_custom_call.1} parent=35 // pred_check_branch
          %327 = sbr.rel (%p325) target = $region52
        $region51: #{tpu_custom_call.1} parent=35 // pred_region
          %328 = dma.done [#allocation8], 256
        $region52: #{tpu_custom_call.1} parent=35 // pred_fallthru
          _
        %s329 = sand.u32 %s47, 1
        %s330 = scalar_lea.sflag [#allocation3], %s329
        %s331 = sand.u32 %s47, 1
        %s332 = smul.addr %s331, 32
        %s333 = scalar_lea.vmem [#allocation2], %s332
        %p334 = pneg %p60
        %p335 = pneg %p57
        %s336 = sand.u32 %s25, 1
        %s337 = scalar_lea.sflag [#allocation5], %s336
        %s338 = sand.u32 %s73, 1
        %s339 = smul.addr %s338, 8
        %s340 = scalar_lea.vmem [#allocation4], %s339
        %p341 = pneg %p86
        %p342 = pneg %p83
        %p343 = pneg %p107
        %p344 = pneg %p104
        %p345 = pneg %p128
        %p346 = pneg %p125
        %p347 = pneg %p156
        %p348 = pneg %p153
        %s349 = smul.u32 8, %s30
        %p350 = scmp.lt.s32.totalorder %s29, 1
        %s351 = scalar_select %p350, %s29, 1
        %p352 = scmp.lt.s32.totalorder %s349, 7
        %s353 = scalar_select %p352, %s349, 7
        %s354 = smul.addr %s351, 32
        %s355 = sadd.s32 %s353, %s354
        %s356 = smul.addr %s355, 4
        %s357 = scalar_lea.vmem %s4, %s356
        %p358 = pneg %p184
        %p359 = pneg %p181
        %s360 = smul.u32 8, %s30
        %p361 = scmp.lt.s32.totalorder %s29, 1
        %s362 = scalar_select %p361, %s29, 1
        %p363 = scmp.lt.s32.totalorder %s360, 7
        %s364 = scalar_select %p363, %s360, 7
        %s365 = smul.addr %s362, 32
        %s366 = sadd.s32 %s364, %s365
        %s367 = smul.addr %s366, 4
        %s368 = scalar_lea.vmem %s5, %s367
        %p369 = pneg %p212
        %p370 = pneg %p209
        %s371 = smul.u32 8, %s30
        %p372 = scmp.lt.s32.totalorder %s29, 1
        %s373 = scalar_select %p372, %s29, 1
        %p374 = scmp.lt.s32.totalorder %s371, 7
        %s375 = scalar_select %p374, %s371, 7
        %s376 = smul.addr %s373, 32
        %s377 = sadd.s32 %s375, %s376
        %s378 = smul.addr %s377, 4
        %s379 = scalar_lea.vmem %s6, %s378
        %s380 = smul.u32 8, %s30
        %s381 = smul.u32 8, %s30
        %p382 = scmp.lt.s32.totalorder %s29, 1
        %s383 = scalar_select %p382, %s29, 1
        %p384 = scmp.lt.s32.totalorder %s381, 7
        %s385 = scalar_select %p384, %s381, 7
        %s386 = smul.addr %s383, 32
        %s387 = sadd.s32 %s385, %s386
        %s388 = smul.addr %s387, 4
        %s389 = scalar_lea.vmem %s4, %s388
        %s390 = smul.u32 8, %s30
        %s391 = smul.u32 8, %s30
        %p392 = scmp.lt.s32.totalorder %s29, 1
        %s393 = scalar_select %p392, %s29, 1
        %p394 = scmp.lt.s32.totalorder %s391, 7
        %s395 = scalar_select %p394, %s391, 7
        %s396 = smul.addr %s393, 32
        %s397 = sadd.s32 %s395, %s396
        %s398 = smul.addr %s397, 4
        %s399 = scalar_lea.vmem %s5, %s398
        %s400 = smul.u32 8, %s30
        %s401 = smul.u32 8, %s30
        %p402 = scmp.lt.s32.totalorder %s29, 1
        %s403 = scalar_select %p402, %s29, 1
        %p404 = scmp.lt.s32.totalorder %s401, 7
        %s405 = scalar_select %p404, %s401, 7
        %s406 = smul.addr %s403, 32
        %s407 = sadd.s32 %s405, %s406
        %s408 = smul.addr %s407, 4
        %s409 = scalar_lea.vmem %s6, %s408
        %s410 = smul.u32 8, %s30
        %v412 = vld [vmem:[%s307] sm:$0xf]
        %v413 = vld [vmem:[%s307 + $0x4] sm:$0xf]
        %v414 = vld [vmem:[%s307 + $0x8] sm:$0xf]
        %v415 = vld [vmem:[%s307 + $0xc] sm:$0xf]
        %v416 = vld [vmem:[%s307 + $0x10] sm:$0xf]
        %v417 = vld [vmem:[%s307 + $0x14] sm:$0xf]
        %v418 = vld [vmem:[%s307 + $0x18] sm:$0xf]
        %v419 = vld [vmem:[%s307 + $0x1c] sm:$0xf]
        %v420 = vld [vmem:[%s316] sm:$0xff]
        %v421 = vunpack.c.l.bf16 %v412
        %v422 = vunpack.c.l.bf16 %v413
        %v423 = vunpack.c.l.bf16 %v414
        %v424 = vunpack.c.l.bf16 %v415
        %v425 = vunpack.c.l.bf16 %v416
        %v426 = vunpack.c.l.bf16 %v417
        %v427 = vunpack.c.l.bf16 %v418
        %v428 = vunpack.c.l.bf16 %v419
        %v429 = vlaneseq
        %v430 = vshrl.u32 %v429, 7
        %v431 = vsub.s32 0, %v430
        %v432 = vrot.slane %v420, %v431
        %v433 = vmul.f32 %v421, %v432
        %v434 = vmul.f32 %v422, %v432
        %v435 = vmul.f32 %v423, %v432
        %v436 = vmul.f32 %v424, %v432
        %v437 = vmul.f32 %v425, %v432
        %v438 = vmul.f32 %v426, %v432
        %v439 = vmul.f32 %v427, %v432
        %v440 = vmul.f32 %v428, %v432
        %v441 = vlaneseq
        %v442 = vshrl.u32 %v441, 7
        %v443 = vsub.s32 1, %v442
        %v444 = vrot.slane %v420, %v443
        %v445 = vadd.f32 %v433, %v444
        %v446 = vadd.f32 %v434, %v444
        %v447 = vadd.f32 %v435, %v444
        %v448 = vadd.f32 %v436, %v444
        %v449 = vadd.f32 %v437, %v444
        %v450 = vadd.f32 %v438, %v444
        %v451 = vadd.f32 %v439, %v444
        %v452 = vadd.f32 %v440, %v444
        %v453 = vpack.c.bf16 %v446, %v445
        %v454 = vpack.c.bf16 %v448, %v447
        %v455 = vpack.c.bf16 %v450, %v449
        %v456 = vpack.c.bf16 %v452, %v451
        %v457 = vld [vmem:[#allocation6] sm:$0xff]
        %v458 = vld [vmem:[#allocation6 + $0x8] sm:$0xff]
        %v459 = vld [vmem:[#allocation6 + $0x10] sm:$0xff]
        %v460 = vld [vmem:[#allocation6 + $0x18] sm:$0xff]
        %v461 = vld [vmem:[#allocation6 + $0x20] sm:$0xff]
        %v462 = vld [vmem:[#allocation6 + $0x28] sm:$0xff]
        %v463 = vld [vmem:[#allocation6 + $0x30] sm:$0xff]
        %v464 = vld [vmem:[#allocation6 + $0x38] sm:$0xff]
        %v465 = vld [vmem:[#allocation7] ss:$8 sm:$0x3]
        %v467 = vlaneseq
        %v468 = vshrl.u32 %v467, 7
        %v469 = vsub.s32 0, %v468
        %v470 = vrot.slane %v465, %v469
        %v471 = vlaneseq
        %v472 = vshrl.u32 %v471, 7
        %v473 = vsub.s32 1, %v472
        %v474 = vrot.slane %v465, %v473
        %v485 = vunpack.c.l.b16 %v457
        %v486 = vunpack.c.h.b16 %v457
        %v487 = vunpack.c.l.b16 %v458
        %v488 = vunpack.c.h.b16 %v458
        %v489 = vunpack.c.l.b16 %v459
        %v490 = vunpack.c.h.b16 %v459
        %v491 = vunpack.c.l.b16 %v460
        %v492 = vunpack.c.h.b16 %v460
        %v493 = vunpack.c.l.b16 %v461
        %v494 = vunpack.c.h.b16 %v461
        %v495 = vunpack.c.l.b16 %v462
        %v496 = vunpack.c.h.b16 %v462
        %v497 = vunpack.c.l.b16 %v463
        %v498 = vunpack.c.h.b16 %v463
        %v499 = vunpack.c.l.b16 %v464
        %v500 = vunpack.c.h.b16 %v464
        %v501 = vpack.c.b16 %v487, %v485
        %v502 = vpack.c.b16 %v488, %v486
        %v503 = vpack.c.b16 %v491, %v489
        %v504 = vpack.c.b16 %v492, %v490
        %v505 = vpack.c.b16 %v495, %v493
        %v506 = vpack.c.b16 %v496, %v494
        %v507 = vpack.c.b16 %v499, %v497
        %v508 = vpack.c.b16 %v500, %v498
        %vm517 = vcmask 523264
        %v519 = vsel %vm517, %v453, 0
        %v522 = vsel %vm517, %v454, 0
        %v525 = vsel %vm517, %v455, 0
        %v528 = vsel %vm517, %v456, 0
        %530 = vmatprep.subr.bf16.mxu0 %v502
        %531 = vmatpush1.bf16.msra.mxu0 %v501
        %532 = vmatprep.subr.bf16.mxu0 %v504
        %533 = vmatpush1.bf16.msra.mxu0 %v503
        %534 = vmatprep.subr.bf16.mxu0 %v506
        %535 = vmatpush1.bf16.msra.mxu0 %v505
        %536 = vmatprep.subr.bf16.mxu0 %v508
        %537 = vmatpush1.bf16.msra.mxu0 %v507
        %538 = vmatprep.subr.bf16.mxu0 0
        %539 = vmatpush1.bf16.msra.mxu0 0
        %540 = vmatprep.subr.bf16.mxu0 0
        %541 = vmatpush1.bf16.msra.mxu0 0
        %542 = vmatprep.subr.bf16.mxu0 0
        %543 = vmatpush1.bf16.msra.mxu0 0
        %544 = vmatprep.subr.bf16.mxu0 0
        %545 = vmatpush1.bf16.msra.mxu0 0
        %546 = vmatprep.subr.bf16.mxu0 0
        %547 = vmatpush1.bf16.msra.mxu0 0
        %548 = vmatprep.subr.bf16.mxu0 0
        %549 = vmatpush1.bf16.msra.mxu0 0
        %550 = vmatprep.subr.bf16.mxu0 0
        %551 = vmatpush1.bf16.msra.mxu0 0
        %552 = vmatprep.subr.bf16.mxu0 0
        %553 = vmatpush1.bf16.msra.mxu0 0
        %554 = vmatprep.subr.bf16.mxu0 0
        %555 = vmatpush1.bf16.msra.mxu0 0
        %556 = vmatprep.subr.bf16.mxu0 0
        %557 = vmatpush1.bf16.msra.mxu0 0
        %558 = vmatprep.subr.bf16.mxu0 0
        %559 = vmatpush1.bf16.msra.mxu0 0
        %560 = vmatprep.subr.bf16.mxu0 0
        %561 = vmatpush1.bf16.msra.mxu0 0
        %562 = vmatprep.mubr.bf16.mxu0 0
        %563 = vmatmul.mubr.bf16.gmra.mrb[0].mxu0 %v519
        %v564 = vpop.f32.mrb[0].mxu0
        %v565 = vadd.f32 %v470, %v564
        %v566 = vpop.f32.mrb[0].mxu0
        %v567 = vadd.f32 %v474, %v566
        %v568 = vpop.f32.mrb[0].mxu0
        %v569 = vadd.f32 %v470, %v568
        %v570 = vpop.f32.mrb[0].mxu0
        %v571 = vadd.f32 %v474, %v570
        %572 = vmatprep.mubr.bf16.mxu0 0
        %573 = vmatmul.mubr.bf16.gmra.mrb[0].mxu0 %v522
        %v574 = vpop.f32.mrb[0].mxu0
        %v575 = vadd.f32 %v470, %v574
        %v576 = vpop.f32.mrb[0].mxu0
        %v577 = vadd.f32 %v474, %v576
        %v578 = vpop.f32.mrb[0].mxu0
        %v579 = vadd.f32 %v470, %v578
        %v580 = vpop.f32.mrb[0].mxu0
        %v581 = vadd.f32 %v474, %v580
        %582 = vmatprep.mubr.bf16.mxu0 0
        %583 = vmatmul.mubr.bf16.gmra.mrb[0].mxu0 %v525
        %v584 = vpop.f32.mrb[0].mxu0
        %v585 = vadd.f32 %v470, %v584
        %v586 = vpop.f32.mrb[0].mxu0
        %v587 = vadd.f32 %v474, %v586
        %v588 = vpop.f32.mrb[0].mxu0
        %v589 = vadd.f32 %v470, %v588
        %v590 = vpop.f32.mrb[0].mxu0
        %v591 = vadd.f32 %v474, %v590
        %592 = vmatprep.mubr.bf16.mxu0 0
        %593 = vmatmul.mubr.bf16.gmra.mrb[0].mxu0 %v528
        %v594 = vpop.f32.mrb[0].mxu0
        %v595 = vadd.f32 %v470, %v594
        %v596 = vpop.f32.mrb[0].mxu0
        %v597 = vadd.f32 %v474, %v596
        %v598 = vpop.f32.mrb[0].mxu0
        %v599 = vadd.f32 %v470, %v598
        %v600 = vpop.f32.mrb[0].mxu0
        %v601 = vadd.f32 %v474, %v600
        %602 = vdwg.mxu0
        %v603 = vpack.c.bf16 %v569, %v565
        %v604 = vpack.c.bf16 %v579, %v575
        %v605 = vpack.c.bf16 %v589, %v585
        %v606 = vpack.c.bf16 %v599, %v595
        %v611 = vunpack.c.l.b16 %v603
        %v612 = vunpack.c.h.b16 %v603
        %v613 = vunpack.c.l.b16 %v604
        %v614 = vunpack.c.h.b16 %v604
        %v615 = vunpack.c.l.b16 %v605
        %v616 = vunpack.c.h.b16 %v605
        %v617 = vunpack.c.l.b16 %v606
        %v618 = vunpack.c.h.b16 %v606
        %v619 = vpack.c.b16 %v611, %v611
        %v620 = vpack.c.b16 %v612, %v612
        %v621 = vpack.c.b16 %v613, %v613
        %v622 = vpack.c.b16 %v614, %v614
        %v623 = vpack.c.b16 %v615, %v615
        %v624 = vpack.c.b16 %v616, %v616
        %v625 = vpack.c.b16 %v617, %v617
        %v626 = vpack.c.b16 %v618, %v618
        %vm635 = vcmask 125952
        %636 = vst.msk [vmem:[%s389] sm:$0xf] %vm635, %v619
        %637 = vst.msk [vmem:[%s389 + $0x4] sm:$0xf] %vm635, %v620
        %638 = vst.msk [vmem:[%s389 + $0x8] sm:$0xf] %vm635, %v621
        %639 = vst.msk [vmem:[%s389 + $0xc] sm:$0xf] %vm635, %v622
        %640 = vst.msk [vmem:[%s389 + $0x10] sm:$0xf] %vm635, %v623
        %641 = vst.msk [vmem:[%s389 + $0x14] sm:$0xf] %vm635, %v624
        %642 = vst.msk [vmem:[%s389 + $0x18] sm:$0xf] %vm635, %v625
        %643 = vst.msk [vmem:[%s389 + $0x1c] sm:$0xf] %vm635, %v626
        %644 = vrot.lane.b32.xlu0 %v619, 64
        %v645 = vpop.permute.xlu0 %644
        %646 = vrot.lane.b32.xlu0 %v620, 64
        %v647 = vpop.permute.xlu0 %646
        %648 = vrot.lane.b32.xlu0 %v621, 64
        %v649 = vpop.permute.xlu0 %648
        %650 = vrot.lane.b32.xlu0 %v622, 64
        %v651 = vpop.permute.xlu0 %650
        %652 = vrot.lane.b32.xlu0 %v623, 64
        %v653 = vpop.permute.xlu0 %652
        %654 = vrot.lane.b32.xlu0 %v624, 64
        %v655 = vpop.permute.xlu0 %654
        %656 = vrot.lane.b32.xlu0 %v625, 64
        %v657 = vpop.permute.xlu0 %656
        %658 = vrot.lane.b32.xlu0 %v626, 64
        %v659 = vpop.permute.xlu0 %658
        %668 = vst.msk [vmem:[%s399] sm:$0xf] %vm635, %v645
        %669 = vst.msk [vmem:[%s399 + $0x4] sm:$0xf] %vm635, %v647
        %670 = vst.msk [vmem:[%s399 + $0x8] sm:$0xf] %vm635, %v649
        %671 = vst.msk [vmem:[%s399 + $0xc] sm:$0xf] %vm635, %v651
        %672 = vst.msk [vmem:[%s399 + $0x10] sm:$0xf] %vm635, %v653
        %673 = vst.msk [vmem:[%s399 + $0x14] sm:$0xf] %vm635, %v655
        %674 = vst.msk [vmem:[%s399 + $0x18] sm:$0xf] %vm635, %v657
        %675 = vst.msk [vmem:[%s399 + $0x1c] sm:$0xf] %vm635, %v659
        %v676 = vpack.c.bf16 %v571, %v567
        %v677 = vpack.c.bf16 %v581, %v577
        %v678 = vpack.c.bf16 %v591, %v587
        %v679 = vpack.c.bf16 %v601, %v597
        %v684 = vunpack.c.l.b16 %v676
        %v685 = vunpack.c.h.b16 %v676
        %v686 = vunpack.c.l.b16 %v677
        %v687 = vunpack.c.h.b16 %v677
        %v688 = vunpack.c.l.b16 %v678
        %v689 = vunpack.c.h.b16 %v678
        %v690 = vunpack.c.l.b16 %v679
        %v691 = vunpack.c.h.b16 %v679
        %v692 = vpack.c.b16 %v684, %v684
        %v693 = vpack.c.b16 %v685, %v685
        %v694 = vpack.c.b16 %v686, %v686
        %v695 = vpack.c.b16 %v687, %v687
        %v696 = vpack.c.b16 %v688, %v688
        %v697 = vpack.c.b16 %v689, %v689
        %v698 = vpack.c.b16 %v690, %v690
        %v699 = vpack.c.b16 %v691, %v691
        %708 = vst.msk [vmem:[%s409] sm:$0xf] %vm635, %v692
        %709 = vst.msk [vmem:[%s409 + $0x4] sm:$0xf] %vm635, %v693
        %710 = vst.msk [vmem:[%s409 + $0x8] sm:$0xf] %vm635, %v694
        %711 = vst.msk [vmem:[%s409 + $0xc] sm:$0xf] %vm635, %v695
        %712 = vst.msk [vmem:[%s409 + $0x10] sm:$0xf] %vm635, %v696
        %713 = vst.msk [vmem:[%s409 + $0x14] sm:$0xf] %vm635, %v697
        %714 = vst.msk [vmem:[%s409 + $0x18] sm:$0xf] %vm635, %v698
        %715 = vst.msk [vmem:[%s409 + $0x1c] sm:$0xf] %vm635, %v699
        %716 = vrot.lane.b32.xlu0 %v619, 112
        %v717 = vpop.permute.xlu0 %716
        %718 = vrot.lane.b32.xlu0 %v620, 112
        %v719 = vpop.permute.xlu0 %718
        %720 = vrot.lane.b32.xlu0 %v621, 112
        %v721 = vpop.permute.xlu0 %720
        %722 = vrot.lane.b32.xlu0 %v622, 112
        %v723 = vpop.permute.xlu0 %722
        %724 = vrot.lane.b32.xlu0 %v623, 112
        %v725 = vpop.permute.xlu0 %724
        %726 = vrot.lane.b32.xlu0 %v624, 112
        %v727 = vpop.permute.xlu0 %726
        %728 = vrot.lane.b32.xlu0 %v625, 112
        %v729 = vpop.permute.xlu0 %728
        %730 = vrot.lane.b32.xlu0 %v626, 112
        %v731 = vpop.permute.xlu0 %730
        %s740 = scalar_lea.vmem %s389, 32
        %741 = vst.msk [vmem:[%s740] sm:$0xf] %vm635, %v717
        %742 = vst.msk [vmem:[%s740 + $0x4] sm:$0xf] %vm635, %v719
        %743 = vst.msk [vmem:[%s740 + $0x8] sm:$0xf] %vm635, %v721
        %744 = vst.msk [vmem:[%s740 + $0xc] sm:$0xf] %vm635, %v723
        %745 = vst.msk [vmem:[%s740 + $0x10] sm:$0xf] %vm635, %v725
        %746 = vst.msk [vmem:[%s740 + $0x14] sm:$0xf] %vm635, %v727
        %747 = vst.msk [vmem:[%s740 + $0x18] sm:$0xf] %vm635, %v729
        %748 = vst.msk [vmem:[%s740 + $0x1c] sm:$0xf] %vm635, %v731
        %749 = vrot.lane.b32.xlu0 %v619, 48
        %v750 = vpop.permute.xlu0 %749
        %751 = vrot.lane.b32.xlu0 %v620, 48
        %v752 = vpop.permute.xlu0 %751
        %753 = vrot.lane.b32.xlu0 %v621, 48
        %v754 = vpop.permute.xlu0 %753
        %755 = vrot.lane.b32.xlu0 %v622, 48
        %v756 = vpop.permute.xlu0 %755
        %757 = vrot.lane.b32.xlu0 %v623, 48
        %v758 = vpop.permute.xlu0 %757
        %759 = vrot.lane.b32.xlu0 %v624, 48
        %v760 = vpop.permute.xlu0 %759
        %761 = vrot.lane.b32.xlu0 %v625, 48
        %v762 = vpop.permute.xlu0 %761
        %763 = vrot.lane.b32.xlu0 %v626, 48
        %v764 = vpop.permute.xlu0 %763
        %s773 = scalar_lea.vmem %s399, 32
        %774 = vst.msk [vmem:[%s773] sm:$0xf] %vm635, %v750
        %775 = vst.msk [vmem:[%s773 + $0x4] sm:$0xf] %vm635, %v752
        %776 = vst.msk [vmem:[%s773 + $0x8] sm:$0xf] %vm635, %v754
        %777 = vst.msk [vmem:[%s773 + $0xc] sm:$0xf] %vm635, %v756
        %778 = vst.msk [vmem:[%s773 + $0x10] sm:$0xf] %vm635, %v758
        %779 = vst.msk [vmem:[%s773 + $0x14] sm:$0xf] %vm635, %v760
        %780 = vst.msk [vmem:[%s773 + $0x18] sm:$0xf] %vm635, %v762
        %781 = vst.msk [vmem:[%s773 + $0x1c] sm:$0xf] %vm635, %v764
        %782 = vrot.lane.b32.xlu0 %v692, 112
        %v783 = vpop.permute.xlu0 %782
        %784 = vrot.lane.b32.xlu0 %v693, 112
        %v785 = vpop.permute.xlu0 %784
        %786 = vrot.lane.b32.xlu0 %v694, 112
        %v787 = vpop.permute.xlu0 %786
        %788 = vrot.lane.b32.xlu0 %v695, 112
        %v789 = vpop.permute.xlu0 %788
        %790 = vrot.lane.b32.xlu0 %v696, 112
        %v791 = vpop.permute.xlu0 %790
        %792 = vrot.lane.b32.xlu0 %v697, 112
        %v793 = vpop.permute.xlu0 %792
        %794 = vrot.lane.b32.xlu0 %v698, 112
        %v795 = vpop.permute.xlu0 %794
        %796 = vrot.lane.b32.xlu0 %v699, 112
        %v797 = vpop.permute.xlu0 %796
        %s806 = scalar_lea.vmem %s409, 32
        %807 = vst.msk [vmem:[%s806] sm:$0xf] %vm635, %v783
        %808 = vst.msk [vmem:[%s806 + $0x4] sm:$0xf] %vm635, %v785
        %809 = vst.msk [vmem:[%s806 + $0x8] sm:$0xf] %vm635, %v787
        %810 = vst.msk [vmem:[%s806 + $0xc] sm:$0xf] %vm635, %v789
        %811 = vst.msk [vmem:[%s806 + $0x10] sm:$0xf] %vm635, %v791
        %812 = vst.msk [vmem:[%s806 + $0x14] sm:$0xf] %vm635, %v793
        %813 = vst.msk [vmem:[%s806 + $0x18] sm:$0xf] %vm635, %v795
        %814 = vst.msk [vmem:[%s806 + $0x1c] sm:$0xf] %vm635, %v797
        %815 = vrot.lane.b32.xlu0 %v619, 96
        %v816 = vpop.permute.xlu0 %815
        %817 = vrot.lane.b32.xlu0 %v620, 96
        %v818 = vpop.permute.xlu0 %817
        %819 = vrot.lane.b32.xlu0 %v621, 96
        %v820 = vpop.permute.xlu0 %819
        %821 = vrot.lane.b32.xlu0 %v622, 96
        %v822 = vpop.permute.xlu0 %821
        %823 = vrot.lane.b32.xlu0 %v623, 96
        %v824 = vpop.permute.xlu0 %823
        %825 = vrot.lane.b32.xlu0 %v624, 96
        %v826 = vpop.permute.xlu0 %825
        %827 = vrot.lane.b32.xlu0 %v625, 96
        %v828 = vpop.permute.xlu0 %827
        %829 = vrot.lane.b32.xlu0 %v626, 96
        %v830 = vpop.permute.xlu0 %829
        %s839 = scalar_lea.vmem %s389, 64
        %840 = vst.msk [vmem:[%s839] sm:$0xf] %vm635, %v816
        %841 = vst.msk [vmem:[%s839 + $0x4] sm:$0xf] %vm635, %v818
        %842 = vst.msk [vmem:[%s839 + $0x8] sm:$0xf] %vm635, %v820
        %843 = vst.msk [vmem:[%s839 + $0xc] sm:$0xf] %vm635, %v822
        %844 = vst.msk [vmem:[%s839 + $0x10] sm:$0xf] %vm635, %v824
        %845 = vst.msk [vmem:[%s839 + $0x14] sm:$0xf] %vm635, %v826
        %846 = vst.msk [vmem:[%s839 + $0x18] sm:$0xf] %vm635, %v828
        %847 = vst.msk [vmem:[%s839 + $0x1c] sm:$0xf] %vm635, %v830
        %848 = vrot.lane.b32.xlu0 %v619, 32
        %v849 = vpop.permute.xlu0 %848
        %850 = vrot.lane.b32.xlu0 %v620, 32
        %v851 = vpop.permute.xlu0 %850
        %852 = vrot.lane.b32.xlu0 %v621, 32
        %v853 = vpop.permute.xlu0 %852
        %854 = vrot.lane.b32.xlu0 %v622, 32
        %v855 = vpop.permute.xlu0 %854
        %856 = vrot.lane.b32.xlu0 %v623, 32
        %v857 = vpop.permute.xlu0 %856
        %858 = vrot.lane.b32.xlu0 %v624, 32
        %v859 = vpop.permute.xlu0 %858
        %860 = vrot.lane.b32.xlu0 %v625, 32
        %v861 = vpop.permute.xlu0 %860
        %862 = vrot.lane.b32.xlu0 %v626, 32
        %v863 = vpop.permute.xlu0 %862
        %s872 = scalar_lea.vmem %s399, 64
        %873 = vst.msk [vmem:[%s872] sm:$0xf] %vm635, %v849
        %874 = vst.msk [vmem:[%s872 + $0x4] sm:$0xf] %vm635, %v851
        %875 = vst.msk [vmem:[%s872 + $0x8] sm:$0xf] %vm635, %v853
        %876 = vst.msk [vmem:[%s872 + $0xc] sm:$0xf] %vm635, %v855
        %877 = vst.msk [vmem:[%s872 + $0x10] sm:$0xf] %vm635, %v857
        %878 = vst.msk [vmem:[%s872 + $0x14] sm:$0xf] %vm635, %v859
        %879 = vst.msk [vmem:[%s872 + $0x18] sm:$0xf] %vm635, %v861
        %880 = vst.msk [vmem:[%s872 + $0x1c] sm:$0xf] %vm635, %v863
        %881 = vrot.lane.b32.xlu0 %v692, 96
        %v882 = vpop.permute.xlu0 %881
        %883 = vrot.lane.b32.xlu0 %v693, 96
        %v884 = vpop.permute.xlu0 %883
        %885 = vrot.lane.b32.xlu0 %v694, 96
        %v886 = vpop.permute.xlu0 %885
        %887 = vrot.lane.b32.xlu0 %v695, 96
        %v888 = vpop.permute.xlu0 %887
        %889 = vrot.lane.b32.xlu0 %v696, 96
        %v890 = vpop.permute.xlu0 %889
        %891 = vrot.lane.b32.xlu0 %v697, 96
        %v892 = vpop.permute.xlu0 %891
        %893 = vrot.lane.b32.xlu0 %v698, 96
        %v894 = vpop.permute.xlu0 %893
        %895 = vrot.lane.b32.xlu0 %v699, 96
        %v896 = vpop.permute.xlu0 %895
        %s905 = scalar_lea.vmem %s409, 64
        %906 = vst.msk [vmem:[%s905] sm:$0xf] %vm635, %v882
        %907 = vst.msk [vmem:[%s905 + $0x4] sm:$0xf] %vm635, %v884
        %908 = vst.msk [vmem:[%s905 + $0x8] sm:$0xf] %vm635, %v886
        %909 = vst.msk [vmem:[%s905 + $0xc] sm:$0xf] %vm635, %v888
        %910 = vst.msk [vmem:[%s905 + $0x10] sm:$0xf] %vm635, %v890
        %911 = vst.msk [vmem:[%s905 + $0x14] sm:$0xf] %vm635, %v892
        %912 = vst.msk [vmem:[%s905 + $0x18] sm:$0xf] %vm635, %v894
        %913 = vst.msk [vmem:[%s905 + $0x1c] sm:$0xf] %vm635, %v896
        %914 = vrot.lane.b32.xlu0 %v619, 80
        %v915 = vpop.permute.xlu0 %914
        %916 = vrot.lane.b32.xlu0 %v620, 80
        %v917 = vpop.permute.xlu0 %916
        %918 = vrot.lane.b32.xlu0 %v621, 80
        %v919 = vpop.permute.xlu0 %918
        %920 = vrot.lane.b32.xlu0 %v622, 80
        %v921 = vpop.permute.xlu0 %920
        %922 = vrot.lane.b32.xlu0 %v623, 80
        %v923 = vpop.permute.xlu0 %922
        %924 = vrot.lane.b32.xlu0 %v624, 80
        %v925 = vpop.permute.xlu0 %924
        %926 = vrot.lane.b32.xlu0 %v625, 80
        %v927 = vpop.permute.xlu0 %926
        %928 = vrot.lane.b32.xlu0 %v626, 80
        %v929 = vpop.permute.xlu0 %928
        %s938 = scalar_lea.vmem %s389, 96
        %939 = vst.msk [vmem:[%s938] sm:$0xf] %vm635, %v915
        %940 = vst.msk [vmem:[%s938 + $0x4] sm:$0xf] %vm635, %v917
        %941 = vst.msk [vmem:[%s938 + $0x8] sm:$0xf] %vm635, %v919
        %942 = vst.msk [vmem:[%s938 + $0xc] sm:$0xf] %vm635, %v921
        %943 = vst.msk [vmem:[%s938 + $0x10] sm:$0xf] %vm635, %v923
        %944 = vst.msk [vmem:[%s938 + $0x14] sm:$0xf] %vm635, %v925
        %945 = vst.msk [vmem:[%s938 + $0x18] sm:$0xf] %vm635, %v927
        %946 = vst.msk [vmem:[%s938 + $0x1c] sm:$0xf] %vm635, %v929
        %947 = vrot.lane.b32.xlu0 %v619, 16
        %v948 = vpop.permute.xlu0 %947
        %949 = vrot.lane.b32.xlu0 %v620, 16
        %v950 = vpop.permute.xlu0 %949
        %951 = vrot.lane.b32.xlu0 %v621, 16
        %v952 = vpop.permute.xlu0 %951
        %953 = vrot.lane.b32.xlu0 %v622, 16
        %v954 = vpop.permute.xlu0 %953
        %955 = vrot.lane.b32.xlu0 %v623, 16
        %v956 = vpop.permute.xlu0 %955
        %957 = vrot.lane.b32.xlu0 %v624, 16
        %v958 = vpop.permute.xlu0 %957
        %959 = vrot.lane.b32.xlu0 %v625, 16
        %v960 = vpop.permute.xlu0 %959
        %961 = vrot.lane.b32.xlu0 %v626, 16
        %v962 = vpop.permute.xlu0 %961
        %s971 = scalar_lea.vmem %s399, 96
        %972 = vst.msk [vmem:[%s971] sm:$0xf] %vm635, %v948
        %973 = vst.msk [vmem:[%s971 + $0x4] sm:$0xf] %vm635, %v950
        %974 = vst.msk [vmem:[%s971 + $0x8] sm:$0xf] %vm635, %v952
        %975 = vst.msk [vmem:[%s971 + $0xc] sm:$0xf] %vm635, %v954
        %976 = vst.msk [vmem:[%s971 + $0x10] sm:$0xf] %vm635, %v956
        %977 = vst.msk [vmem:[%s971 + $0x14] sm:$0xf] %vm635, %v958
        %978 = vst.msk [vmem:[%s971 + $0x18] sm:$0xf] %vm635, %v960
        %979 = vst.msk [vmem:[%s971 + $0x1c] sm:$0xf] %vm635, %v962
        %980 = vrot.lane.b32.xlu0 %v692, 80
        %v981 = vpop.permute.xlu0 %980
        %982 = vrot.lane.b32.xlu0 %v693, 80
        %v983 = vpop.permute.xlu0 %982
        %984 = vrot.lane.b32.xlu0 %v694, 80
        %v985 = vpop.permute.xlu0 %984
        %986 = vrot.lane.b32.xlu0 %v695, 80
        %v987 = vpop.permute.xlu0 %986
        %988 = vrot.lane.b32.xlu0 %v696, 80
        %v989 = vpop.permute.xlu0 %988
        %990 = vrot.lane.b32.xlu0 %v697, 80
        %v991 = vpop.permute.xlu0 %990
        %992 = vrot.lane.b32.xlu0 %v698, 80
        %v993 = vpop.permute.xlu0 %992
        %994 = vrot.lane.b32.xlu0 %v699, 80
        %v995 = vpop.permute.xlu0 %994
        %s1004 = scalar_lea.vmem %s409, 96
        %1005 = vst.msk [vmem:[%s1004] sm:$0xf] %vm635, %v981
        %1006 = vst.msk [vmem:[%s1004 + $0x4] sm:$0xf] %vm635, %v983
        %1007 = vst.msk [vmem:[%s1004 + $0x8] sm:$0xf] %vm635, %v985
        %1008 = vst.msk [vmem:[%s1004 + $0xc] sm:$0xf] %vm635, %v987
        %1009 = vst.msk [vmem:[%s1004 + $0x10] sm:$0xf] %vm635, %v989
        %1010 = vst.msk [vmem:[%s1004 + $0x14] sm:$0xf] %vm635, %v991
        %1011 = vst.msk [vmem:[%s1004 + $0x18] sm:$0xf] %vm635, %v993
        %1012 = vst.msk [vmem:[%s1004 + $0x1c] sm:$0xf] %vm635, %v995
        %s1013 = smul.u32 8, %s30
        %p1014 = scmp.lt.s32.totalorder %s29, 1
        %s1015 = scalar_select %p1014, %s29, 1
        %p1016 = scmp.lt.s32.totalorder %s1013, 7
        %s1017 = scalar_select %p1016, %s1013, 7
        %s1018 = smul.addr %s1015, 32
        %s1019 = sadd.s32 %s1017, %s1018
        %s1020 = smul.addr %s1019, 4
        %s1021 = scalar_lea.vmem %s4, %s1020
        %s1022 = smul.u32 8, %s30
        %p1023 = scmp.lt.s32.totalorder %s29, 1
        %s1024 = scalar_select %p1023, %s29, 1
        %p1025 = scmp.lt.s32.totalorder %s1022, 7
        %s1026 = scalar_select %p1025, %s1022, 7
        %s1027 = smul.addr %s1024, 32
        %s1028 = sadd.s32 %s1026, %s1027
        %s1029 = smul.addr %s1028, 4
        %s1030 = scalar_lea.vmem %s5, %s1029
        %s1031 = smul.u32 8, %s30
        %p1032 = scmp.lt.s32.totalorder %s29, 1
        %s1033 = scalar_select %p1032, %s29, 1
        %p1034 = scmp.lt.s32.totalorder %s1031, 7
        %s1035 = scalar_select %p1034, %s1031, 7
        %s1036 = smul.addr %s1033, 32
        %s1037 = sadd.s32 %s1035, %s1036
        %s1038 = smul.addr %s1037, 4
        %s1039 = scalar_lea.vmem %s6, %s1038
        // Predicated region
        $region53: #{tpu_custom_call.1} parent=35 // pred_check
          %p1040 = pneg %p153
        $region54: #{tpu_custom_call.1} parent=35 // pred_check_branch
          %1042 = sbr.rel (%p1040) target = $region56
        $region55: #{tpu_custom_call.1} parent=35 // pred_region
          %s1043 = smul.u32 8, %s30
        $region56: #{tpu_custom_call.1} parent=35 // pred_fallthru
          _
        // Predicated region
        $region57: #{tpu_custom_call.1} parent=35 // pred_check
          %p1044 = pneg %p181
        $region58: #{tpu_custom_call.1} parent=35 // pred_check_branch
          %1046 = sbr.rel (%p1044) target = $region60
        $region59: #{tpu_custom_call.1} parent=35 // pred_region
          %s1047 = smul.u32 8, %s30
        $region60: #{tpu_custom_call.1} parent=35 // pred_fallthru
          _
        // Predicated region
        $region61: #{tpu_custom_call.1} parent=35 // pred_check
          %p1048 = pneg %p209
        $region62: #{tpu_custom_call.1} parent=35 // pred_check_branch
          %1050 = sbr.rel (%p1048) target = $region64
        $region63: #{tpu_custom_call.1} parent=35 // pred_region
          %s1051 = smul.u32 8, %s30
        $region64: #{tpu_custom_call.1} parent=35 // pred_fallthru
          _
      $region36: #{tpu_custom_call.1} parent=5 // pred_fallthru
        _
      %p1052 = scmp.le.s32.totalorder 2, %s20
      // Predicated region
      $region65: #{tpu_custom_call.1} parent=5 // pred_check
        %p1053 = pneg %p1052
      $region66: #{tpu_custom_call.1} parent=5 // pred_check_branch
        %1055 = sbr.rel (%p1053) target = $region68
      $region67: #{tpu_custom_call.1} parent=5 // pred_region
        %s1056 = ssub.s32 %s20, 2
        // Predicated region
        $region69: #{tpu_custom_call.1} parent=67 // pred_check
          %p1057 = pneg %p159
        $region70: #{tpu_custom_call.1} parent=67 // pred_check_branch
          %1059 = sbr.rel (%p1057) target = $region72
        $region71: #{tpu_custom_call.1} parent=67 // pred_region
          %s1060 = smul.u32 8, %s32
          %p1061 = scmp.lt.s32.totalorder %s31, 1
          %s1062 = scalar_select %p1061, %s31, 1
          %p1063 = scmp.lt.s32.totalorder %s1060, 7
          %s1064 = scalar_select %p1063, %s1060, 7
          %s1065 = smul.addr %s1062, 32
          %s1066 = sadd.s32 %s1064, %s1065
          %s1067 = smul.addr %s1066, 4
          %s1068 = scalar_lea.vmem %s4, %s1067
        $region72: #{tpu_custom_call.1} parent=67 // pred_fallthru
          _
        // Predicated region
        $region73: #{tpu_custom_call.1} parent=67 // pred_check
          %p1069 = pneg %p187
        $region74: #{tpu_custom_call.1} parent=67 // pred_check_branch
          %1071 = sbr.rel (%p1069) target = $region76
        $region75: #{tpu_custom_call.1} parent=67 // pred_region
          %s1072 = smul.u32 8, %s32
          %p1073 = scmp.lt.s32.totalorder %s31, 1
          %s1074 = scalar_select %p1073, %s31, 1
          %p1075 = scmp.lt.s32.totalorder %s1072, 7
          %s1076 = scalar_select %p1075, %s1072, 7
          %s1077 = smul.addr %s1074, 32
          %s1078 = sadd.s32 %s1076, %s1077
          %s1079 = smul.addr %s1078, 4
          %s1080 = scalar_lea.vmem %s5, %s1079
        $region76: #{tpu_custom_call.1} parent=67 // pred_fallthru
          _
        // Predicated region
        $region77: #{tpu_custom_call.1} parent=67 // pred_check
          %p1081 = pneg %p215
        $region78: #{tpu_custom_call.1} parent=67 // pred_check_branch
          %1083 = sbr.rel (%p1081) target = $region80
        $region79: #{tpu_custom_call.1} parent=67 // pred_region
          %s1084 = smul.u32 8, %s32
          %p1085 = scmp.lt.s32.totalorder %s31, 1
          %s1086 = scalar_select %p1085, %s31, 1
          %p1087 = scmp.lt.s32.totalorder %s1084, 7
          %s1088 = scalar_select %p1087, %s1084, 7
          %s1089 = smul.addr %s1086, 32
          %s1090 = sadd.s32 %s1088, %s1089
          %s1091 = smul.addr %s1090, 4
          %s1092 = scalar_lea.vmem %s6, %s1091
        $region80: #{tpu_custom_call.1} parent=67 // pred_fallthru
          _
      $region68: #{tpu_custom_call.1} parent=5 // pred_fallthru
        _
    $region6: #{tpu_custom_call.1} parent=1 // loop_footer
      %s24 = sadd.s32 1, %s20
    $region7: #{tpu_custom_call.1} parent=1 // loop_footer_branch
      %19 = sbr.rel target = $region3
    $region8: #{tpu_custom_call.1} parent=1 // loop_exit
      _
    %1093 = vsyncpa [#allocation3], 1
    %s1094 = scalar_lea.sflag [#allocation3], 1
    %1095 = vsyncpa %s1094, 1
    %1096 = vsyncpa [#allocation5], 1
    %s1097 = scalar_lea.sflag [#allocation5], 1
    %1098 = vsyncpa %s1097, 1
    %1099 = vsyncpa [#allocation8], 1

// kernel: tpu_custom_call.1
$region0: #{tpu_custom_call.1}
  #allocation0 [shape = 'u32[]', space=smem, size = 0x4, offset = 0x4, fixed_abs, tag = 'smem constant byte address 0x4 - core index']
  #allocation1 [shape = 'u32[144,128]{1,0:T(1,128)}', space=vmem, size = 0x12000, scoped, tag = 'internal scratch']
  %s0 = inlined_call_operand.hbm [shape: bf16[2,64,64], index: 0, kind: input, shape index: {}]
  %s1 = inlined_call_operand.hbm [shape: f32[2,8,64], index: 1, kind: input, shape index: {}]
  %s2 = inlined_call_operand.hbm [shape: bf16[64,192], index: 2, kind: input, shape index: {}]
  %s3 = inlined_call_operand.hbm [shape: f32[8,192], index: 3, kind: input, shape index: {}]
  %s4 = inlined_call_operand.vmem [shape: bf16[2,4,64,16], index: 4, kind: output, shape index: {0}]
  %s5 = inlined_call_operand.vmem [shape: bf16[2,4,64,16], index: 5, kind: output, shape index: {1}]
  %s6 = inlined_call_operand.vmem [shape: bf16[2,4,64,16], index: 6, kind: output, shape index: {2}]
  %7 = xla_tuple %s4, %s5, %s6
  %s8 = sld [smem:[#allocation0]]
  $region81: #{tpu_custom_call.1} parent=0
    _
  %s10 = ssub.s32 1, %s8
  %s11 = scalar_select 0, %s10, %s8
  $region1: #{tpu_custom_call.1} parent=0
    #allocation2 [shape = 'u8[32768]{0}', space=vmem, size = 0x8000, scoped, tag = 'input window, operand 0']
    #allocation3 [shape = 's32[2]{0}', space=sflag, size = 0x8, scoped, tag = 'scoped memory for tpu_custom_call.1']
    #allocation4 [shape = 'u8[8192]{0}', space=vmem, size = 0x2000, scoped, tag = 'input window, operand 1']
    #allocation5 [shape = 's32[2]{0}', space=sflag, size = 0x8, scoped, tag = 'scoped memory for tpu_custom_call.1']
    #allocation6 [shape = 'u8[32768]{0}', space=vmem, size = 0x8000, scoped, tag = 'input window, operand 2, single buffered']
    #allocation7 [shape = 'u8[8192]{0}', space=vmem, size = 0x2000, scoped, tag = 'input window, operand 3, single buffered']
    #allocation8 [shape = 's32[1]{0}', space=sflag, size = 0x4, scoped, tag = 'scoped memory for tpu_custom_call.1']
    %12 = vsyncpa [#allocation3], 0
    %s13 = scalar_lea.sflag [#allocation3], 1
    %14 = vsyncpa %s13, 0
    %15 = vsyncpa [#allocation5], 0
    %s16 = scalar_lea.sflag [#allocation5], 1
    %17 = vsyncpa %s16, 0
    %18 = vsyncpa [#allocation8], 0
    loop: start=0, step=1, limit=4
    $region2: #{tpu_custom_call.1} parent=1 // loop_pre_header
      _
    $region3: #{tpu_custom_call.1} parent=1 // loop_header
      %s20 = sphi 0, %s24
      %p21 = scmp.ge.s32.totalorder %s20, 4
      %s27 = sphi 0, %s39
      %s28 = sphi 0, %s35
      %s29 = sphi 0, %s27
      %s30 = sphi 0, %s28
      %s31 = sphi 0, %s29
      %s32 = sphi 0, %s30
      %s44 = sphi 0, %s46
      %s47 = sphi 0, %s44
      %s48 = sphi 0, %s47
      %s64 = sphi 0, %s48
      %s70 = sphi 0, %s72
      %s73 = sphi 0, %s70
      %s74 = sphi 0, %s73
      %s90 = sphi 0, %s74
      %s94 = sphi 0, %s94
      %s96 = sphi 0, %s94
      %s97 = sphi 0, %s96
      %s111 = sphi 0, %s97
      %s115 = sphi 0, %s115
      %s117 = sphi 0, %s115
      %s118 = sphi 0, %s117
      %s132 = sphi 0, %s118
      %s140 = sphi 0, %s142
      %s143 = sphi 0, %s140
      %s144 = sphi 0, %s143
      %s160 = sphi 0, %s144
      %s168 = sphi 0, %s170
      %s171 = sphi 0, %s168
      %s172 = sphi 0, %s171
      %s188 = sphi 0, %s172
      %s196 = sphi 0, %s198
      %s199 = sphi 0, %s196
      %s200 = sphi 0, %s199
      %s216 = sphi 0, %s200
    $region4: #{tpu_custom_call.1} parent=1 // loop_header_branch
      %23 = sbr.rel (%p21) target = $region8
    $region5: #{tpu_custom_call.1} parent=1 // loop_body
      %s25 = ssub.s32 %s20, 1
      %s26 = ssub.s32 %s20, 2
      %s33 = sadd.s32 1, %s28
      %p34 = scmp.ge.s32.totalorder %s33, 1
      %s35 = scalar_select %p34, 0, %s33
      %s36 = sadd.s32 1, %s27
      %s37 = scalar_select %p34, %s36, %s27
      %p38 = scmp.ge.s32.totalorder %s37, 2
      %s39 = scalar_select %p38, 0, %s37
      %s40 = ssub.s32 %s27, %s39
      %s41 = ssub.s32 %s28, %s35
      %s42 = sor.u32 %s40, %s41
      %p43 = scmp.eq.s32.totalorder %s42, 0
      %s45 = sadd.s32 %s44, 1
      %s46 = scalar_select %p43, %s44, %s45
      %p49 = pneg %p43
      %p50 = scmp.eq.s32.totalorder %s20, 1
      %p51 = por %p49, %p50
      %p52 = scmp.ne.s32.totalorder %s44, %s47
      %p53 = scmp.eq.s32.totalorder %s20, 0
      %p54 = por %p52, %p53
      %p55 = scmp.ne.s32.totalorder %s44, %s47
      %p56 = scmp.eq.s32.totalorder %s25, 1
      %p57 = por %p55, %p56
      %p58 = scmp.ne.s32.totalorder %s47, %s48
      %p59 = scmp.eq.s32.totalorder %s25, 0
      %p60 = por %p58, %p59
      %p61 = scmp.ne.s32.totalorder %s47, %s48
      %p62 = scmp.eq.s32.totalorder %s26, 1
      %p63 = por %p61, %p62
      %p65 = scmp.ne.s32.totalorder %s48, %s64
      %p66 = scmp.eq.s32.totalorder %s26, 0
      %p67 = por %p65, %p66
      %s68 = ssub.s32 %s27, %s39
      %p69 = scmp.eq.s32.totalorder %s68, 0
      %s71 = sadd.s32 %s70, 1
      %s72 = scalar_select %p69, %s70, %s71
      %p75 = pneg %p69
      %p76 = scmp.eq.s32.totalorder %s20, 1
      %p77 = por %p75, %p76
      %p78 = scmp.ne.s32.totalorder %s70, %s73
      %p79 = scmp.eq.s32.totalorder %s20, 0
      %p80 = por %p78, %p79
      %p81 = scmp.ne.s32.totalorder %s70, %s73
      %p82 = scmp.eq.s32.totalorder %s25, 1
      %p83 = por %p81, %p82
      %p84 = scmp.ne.s32.totalorder %s73, %s74
      %p85 = scmp.eq.s32.totalorder %s25, 0
      %p86 = por %p84, %p85
      %p87 = scmp.ne.s32.totalorder %s73, %s74
      %p88 = scmp.eq.s32.totalorder %s26, 1
      %p89 = por %p87, %p88
      %p91 = scmp.ne.s32.totalorder %s74, %s90
      %p92 = scmp.eq.s32.totalorder %s26, 0
      %p93 = por %p91, %p92
      %s95 = sadd.s32 %s94, 1
      %p98 = scmp.eq.s32.totalorder %s20, 1
      %p99 = scmp.ne.s32.totalorder %s94, %s96
      %p100 = scmp.eq.s32.totalorder %s20, 0
      %p101 = por %p99, %p100
      %p102 = scmp.ne.s32.totalorder %s94, %s96
      %p103 = scmp.eq.s32.totalorder %s25, 1
      %p104 = por %p102, %p103
      %p105 = scmp.ne.s32.totalorder %s96, %s97
      %p106 = scmp.eq.s32.totalorder %s25, 0
      %p107 = por %p105, %p106
      %p108 = scmp.ne.s32.totalorder %s96, %s97
      %p109 = scmp.eq.s32.totalorder %s26, 1
      %p110 = por %p108, %p109
      %p112 = scmp.ne.s32.totalorder %s97, %s111
      %p113 = scmp.eq.s32.totalorder %s26, 0
      %p114 = por %p112, %p113
      %s116 = sadd.s32 %s115, 1
      %p119 = scmp.eq.s32.totalorder %s20, 1
      %p120 = scmp.ne.s32.totalorder %s115, %s117
      %p121 = scmp.eq.s32.totalorder %s20, 0
      %p122 = por %p120, %p121
      %p123 = scmp.ne.s32.totalorder %s115, %s117
      %p124 = scmp.eq.s32.totalorder %s25, 1
      %p125 = por %p123, %p124
      %p126 = scmp.ne.s32.totalorder %s117, %s118
      %p127 = scmp.eq.s32.totalorder %s25, 0
      %p128 = por %p126, %p127
      %p129 = scmp.ne.s32.totalorder %s117, %s118
      %p130 = scmp.eq.s32.totalorder %s26, 1
      %p131 = por %p129, %p130
      %p133 = scmp.ne.s32.totalorder %s118, %s132
      %p134 = scmp.eq.s32.totalorder %s26, 0
      %p135 = por %p133, %p134
      %s136 = ssub.s32 %s27, %s39
      %s137 = ssub.s32 %s28, %s35
      %s138 = sor.u32 %s136, %s137
      %p139 = scmp.eq.s32.totalorder %s138, 0
      %s141 = sadd.s32 %s140, 1
      %s142 = scalar_select %p139, %s140, %s141
      %p145 = pneg %p139
      %p146 = scmp.eq.s32.totalorder %s20, 1
      %p147 = por %p145, %p146
      %p148 = scmp.ne.s32.totalorder %s140, %s143
      %p149 = scmp.eq.s32.totalorder %s20, 0
      %p150 = por %p148, %p149
      %p151 = scmp.ne.s32.totalorder %s140, %s143
      %p152 = scmp.eq.s32.totalorder %s25, 1
      %p153 = por %p151, %p152
      %p154 = scmp.ne.s32.totalorder %s143, %s144
      %p155 = scmp.eq.s32.totalorder %s25, 0
      %p156 = por %p154, %p155
      %p157 = scmp.ne.s32.totalorder %s143, %s144
      %p158 = scmp.eq.s32.totalorder %s26, 1
      %p159 = por %p157, %p158
      %p161 = scmp.ne.s32.totalorder %s144, %s160
      %p162 = scmp.eq.s32.totalorder %s26, 0
      %p163 = por %p161, %p162
      %s164 = ssub.s32 %s27, %s39
      %s165 = ssub.s32 %s28, %s35
      %s166 = sor.u32 %s164, %s165
      %p167 = scmp.eq.s32.totalorder %s166, 0
      %s169 = sadd.s32 %s168, 1
      %s170 = scalar_select %p167, %s168, %s169
      %p173 = pneg %p167
      %p174 = scmp.eq.s32.totalorder %s20, 1
      %p175 = por %p173, %p174
      %p176 = scmp.ne.s32.totalorder %s168, %s171
      %p177 = scmp.eq.s32.totalorder %s20, 0
      %p178 = por %p176, %p177
      %p179 = scmp.ne.s32.totalorder %s168, %s171
      %p180 = scmp.eq.s32.totalorder %s25, 1
      %p181 = por %p179, %p180
      %p182 = scmp.ne.s32.totalorder %s171, %s172
      %p183 = scmp.eq.s32.totalorder %s25, 0
      %p184 = por %p182, %p183
      %p185 = scmp.ne.s32.totalorder %s171, %s172
      %p186 = scmp.eq.s32.totalorder %s26, 1
      %p187 = por %p185, %p186
      %p189 = scmp.ne.s32.totalorder %s172, %s188
      %p190 = scmp.eq.s32.totalorder %s26, 0
      %p191 = por %p189, %p190
      %s192 = ssub.s32 %s27, %s39
      %s193 = ssub.s32 %s28, %s35
      %s194 = sor.u32 %s192, %s193
      %p195 = scmp.eq.s32.totalorder %s194, 0
      %s197 = sadd.s32 %s196, 1
      %s198 = scalar_select %p195, %s196, %s197
      %p201 = pneg %p195
      %p202 = scmp.eq.s32.totalorder %s20, 1
      %p203 = por %p201, %p202
      %p204 = scmp.ne.s32.totalorder %s196, %s199
      %p205 = scmp.eq.s32.totalorder %s20, 0
      %p206 = por %p204, %p205
      %p207 = scmp.ne.s32.totalorder %s196, %s199
      %p208 = scmp.eq.s32.totalorder %s25, 1
      %p209 = por %p207, %p208
      %p210 = scmp.ne.s32.totalorder %s199, %s200
      %p211 = scmp.eq.s32.totalorder %s25, 0
      %p212 = por %p210, %p211
      %p213 = scmp.ne.s32.totalorder %s199, %s200
      %p214 = scmp.eq.s32.totalorder %s26, 1
      %p215 = por %p213, %p214
      %p217 = scmp.ne.s32.totalorder %s200, %s216
      %p218 = scmp.eq.s32.totalorder %s26, 0
      %p219 = por %p217, %p218
      %p220 = scmp.le.s32.totalorder 1, %s20
      %p221 = scmp.lt.s32.totalorder %s20, 3
      %p222 = pnand %p220, %p221
      %p223 = pneg %p222
      // Predicated region
      $region9: #{tpu_custom_call.1} parent=5 // pred_check
        _
      $region10: #{tpu_custom_call.1} parent=5 // pred_check_branch
        %225 = sbr.rel (%p222) target = $region12
      $region11: #{tpu_custom_call.1} parent=5 // pred_region
        %s226 = ssub.s32 %s20, 1
        // Predicated region
        $region13: #{tpu_custom_call.1} parent=11 // pred_check
          %p227 = pneg %p107
        $region14: #{tpu_custom_call.1} parent=11 // pred_check_branch
          %229 = sbr.rel (%p227) target = $region16
        $region15: #{tpu_custom_call.1} parent=11 // pred_region
          %s231 = ssub.s32 1024, 1024
          %232 = vsyncadd [#allocation5], %s231
          %s233 = sshll.u32 [#allocation6], 4
          %s234 = int_to_ptr.vmem [resolvable:$true] %s233
          %239 = dma.hbm_to_vmem [thread:$0]  %s2, 1024, %s234, [#allocation5], 128, 128, 8
        $region16: #{tpu_custom_call.1} parent=11 // pred_fallthru
          _
        // Predicated region
        $region17: #{tpu_custom_call.1} parent=11 // pred_check
          %p240 = pneg %p128
        $region18: #{tpu_custom_call.1} parent=11 // pred_check_branch
          %242 = sbr.rel (%p240) target = $region20
        $region19: #{tpu_custom_call.1} parent=11 // pred_region
          %s244 = ssub.s32 256, 256
          %245 = vsyncadd [#allocation8], %s244
          %s247 = sshll.u32 [#allocation7], 4
          %s248 = int_to_ptr.vmem [resolvable:$true] %s247
          %250 = dma.hbm_to_vmem [thread:$0]  %s3, 256, %s248, [#allocation8]
        $region20: #{tpu_custom_call.1} parent=11 // pred_fallthru
          _
      $region12: #{tpu_custom_call.1} parent=5 // pred_fallthru
        _
      %p251 = scmp.lt.s32.totalorder %s20, 2
      // Predicated region
      $region21: #{tpu_custom_call.1} parent=5 // pred_check
        %p252 = pneg %p251
      $region22: #{tpu_custom_call.1} parent=5 // pred_check_branch
        %254 = sbr.rel (%p252) target = $region24
      $region23: #{tpu_custom_call.1} parent=5 // pred_region
        // Predicated region
        $region25: #{tpu_custom_call.1} parent=23 // pred_check
          %p255 = pneg %p54
        $region26: #{tpu_custom_call.1} parent=23 // pred_check_branch
          %257 = sbr.rel (%p255) target = $region28
        $region27: #{tpu_custom_call.1} parent=23 // pred_region
          %s258 = sand.u32 %s44, 1
          %s259 = scalar_lea.sflag [#allocation3], %s258
          %s260 = sand.u32 %s44, 1
          %s261 = smul.addr %s260, 32
          %s262 = scalar_lea.vmem [#allocation2], %s261
          %s263 = smul.u32 8, %s28
          %s265 = ssub.s32 512, 512
          %266 = vsyncadd %s259, %s265
          %s267 = smul.addr %s27, 8
          %s268 = sadd.s32 %s263, %s267
          %s269 = smul.addr %s268, 64
          %s270 = scalar_lea.hbm %s0, %s269
          %s271 = sshll.u32 %s262, 4
          %s272 = int_to_ptr.vmem [resolvable:$true] %s271
          %277 = dma.hbm_to_vmem [thread:$0]  %s270, 512, %s272, %s259, 64, 64, 4
        $region28: #{tpu_custom_call.1} parent=23 // pred_fallthru
          _
        // Predicated region
        $region29: #{tpu_custom_call.1} parent=23 // pred_check
          %p278 = pneg %p80
        $region30: #{tpu_custom_call.1} parent=23 // pred_check_branch
          %280 = sbr.rel (%p278) target = $region32
        $region31: #{tpu_custom_call.1} parent=23 // pred_region
          %s281 = sand.u32 %s20, 1
          %s282 = scalar_lea.sflag [#allocation5], %s281
          %s283 = sand.u32 %s70, 1
          %s284 = smul.addr %s283, 8
          %s285 = scalar_lea.vmem [#allocation4], %s284
          %s287 = ssub.s32 128, 128
          %288 = vsyncadd %s282, %s287
          %s289 = smul.addr %s27, 128
          %s290 = scalar_lea.hbm %s1, %s289
          %s292 = sshll.u32 %s285, 4
          %s293 = int_to_ptr.vmem [resolvable:$true] %s292
          %295 = dma.hbm_to_vmem [thread:$0]  %s290, 128, %s293, %s282
        $region32: #{tpu_custom_call.1} parent=23 // pred_fallthru
          _
      $region24: #{tpu_custom_call.1} parent=5 // pred_fallthru
        _
      %p296 = scmp.le.s32.totalorder 1, %s20
      %p297 = scmp.lt.s32.totalorder %s20, 3
      %p298 = pnand %p296, %p297
      %p299 = pneg %p298
      // Predicated region
      $region33: #{tpu_custom_call.1} parent=5 // pred_check
        _
      $region34: #{tpu_custom_call.1} parent=5 // pred_check_branch
        %301 = sbr.rel (%p298) target = $region36
      $region35: #{tpu_custom_call.1} parent=5 // pred_region
        %s302 = ssub.s32 %s20, 1
        %s303 = sand.u32 %s47, 1
        %s304 = scalar_lea.sflag [#allocation3], %s303
        %s305 = sand.u32 %s47, 1
        %s306 = smul.addr %s305, 32
        %s307 = scalar_lea.vmem [#allocation2], %s306
        // Predicated region
        $region37: #{tpu_custom_call.1} parent=35 // pred_check
          %p308 = pneg %p60
        $region38: #{tpu_custom_call.1} parent=35 // pred_check_branch
          %310 = sbr.rel (%p308) target = $region40
        $region39: #{tpu_custom_call.1} parent=35 // pred_region
          %311 = dma.done %s304, 512
        $region40: #{tpu_custom_call.1} parent=35 // pred_fallthru
          _
        %s312 = sand.u32 %s25, 1
        %s313 = scalar_lea.sflag [#allocation5], %s312
        %s314 = sand.u32 %s73, 1
        %s315 = smul.addr %s314, 8
        %s316 = scalar_lea.vmem [#allocation4], %s315
        // Predicated region
        $region41: #{tpu_custom_call.1} parent=35 // pred_check
          %p317 = pneg %p86
        $region42: #{tpu_custom_call.1} parent=35 // pred_check_branch
          %319 = sbr.rel (%p317) target = $region44
        $region43: #{tpu_custom_call.1} parent=35 // pred_region
          %320 = dma.done %s313, 128
        $region44: #{tpu_custom_call.1} parent=35 // pred_fallthru
          _
        // Predicated region
        $region45: #{tpu_custom_call.1} parent=35 // pred_check
          %p321 = pneg %p107
        $region46: #{tpu_custom_call.1} parent=35 // pred_check_branch
          %323 = sbr.rel (%p321) target = $region48
        $region47: #{tpu_custom_call.1} parent=35 // pred_region
          %324 = dma.done [#allocation5], 1024
        $region48: #{tpu_custom_call.1} parent=35 // pred_fallthru
          _
        // Predicated region
        $region49: #{tpu_custom_call.1} parent=35 // pred_check
          %p325 = pneg %p128
        $region50: #{tpu_custom_call.1} parent=35 // pred_check_branch
          %327 = sbr.rel (%p325) target = $region52
        $region51: #{tpu_custom_call.1} parent=35 // pred_region
          %328 = dma.done [#allocation8], 256
        $region52: #{tpu_custom_call.1} parent=35 // pred_fallthru
          _
        %s329 = sand.u32 %s47, 1
        %s330 = scalar_lea.sflag [#allocation3], %s329
        %s331 = sand.u32 %s47, 1
        %s332 = smul.addr %s331, 32
        %s333 = scalar_lea.vmem [#allocation2], %s332
        %p334 = pneg %p60
        %p335 = pneg %p57
        %s336 = sand.u32 %s25, 1
        %s337 = scalar_lea.sflag [#allocation5], %s336
        %s338 = sand.u32 %s73, 1
        %s339 = smul.addr %s338, 8
        %s340 = scalar_lea.vmem [#allocation4], %s339
        %p341 = pneg %p86
        %p342 = pneg %p83
        %p343 = pneg %p107
        %p344 = pneg %p104
        %p345 = pneg %p128
        %p346 = pneg %p125
        %p347 = pneg %p156
        %p348 = pneg %p153
        %s349 = smul.u32 8, %s30
        %p350 = scmp.lt.s32.totalorder %s29, 1
        %s351 = scalar_select %p350, %s29, 1
        %p352 = scmp.lt.s32.totalorder %s349, 7
        %s353 = scalar_select %p352, %s349, 7
        %s354 = smul.addr %s351, 32
        %s355 = sadd.s32 %s353, %s354
        %s356 = smul.addr %s355, 4
        %s357 = scalar_lea.vmem %s4, %s356
        %p358 = pneg %p184
        %p359 = pneg %p181
        %s360 = smul.u32 8, %s30
        %p361 = scmp.lt.s32.totalorder %s29, 1
        %s362 = scalar_select %p361, %s29, 1
        %p363 = scmp.lt.s32.totalorder %s360, 7
        %s364 = scalar_select %p363, %s360, 7
        %s365 = smul.addr %s362, 32
        %s366 = sadd.s32 %s364, %s365
        %s367 = smul.addr %s366, 4
        %s368 = scalar_lea.vmem %s5, %s367
        %p369 = pneg %p212
        %p370 = pneg %p209
        %s371 = smul.u32 8, %s30
        %p372 = scmp.lt.s32.totalorder %s29, 1
        %s373 = scalar_select %p372, %s29, 1
        %p374 = scmp.lt.s32.totalorder %s371, 7
        %s375 = scalar_select %p374, %s371, 7
        %s376 = smul.addr %s373, 32
        %s377 = sadd.s32 %s375, %s376
        %s378 = smul.addr %s377, 4
        %s379 = scalar_lea.vmem %s6, %s378
        %s380 = smul.u32 8, %s30
        %s381 = smul.u32 8, %s30
        %p382 = scmp.lt.s32.totalorder %s29, 1
        %s383 = scalar_select %p382, %s29, 1
        %p384 = scmp.lt.s32.totalorder %s381, 7
        %s385 = scalar_select %p384, %s381, 7
        %s386 = smul.addr %s383, 32
        %s387 = sadd.s32 %s385, %s386
        %s388 = smul.addr %s387, 4
        %s389 = scalar_lea.vmem %s4, %s388
        %s390 = smul.u32 8, %s30
        %s391 = smul.u32 8, %s30
        %p392 = scmp.lt.s32.totalorder %s29, 1
        %s393 = scalar_select %p392, %s29, 1
        %p394 = scmp.lt.s32.totalorder %s391, 7
        %s395 = scalar_select %p394, %s391, 7
        %s396 = smul.addr %s393, 32
        %s397 = sadd.s32 %s395, %s396
        %s398 = smul.addr %s397, 4
        %s399 = scalar_lea.vmem %s5, %s398
        %s400 = smul.u32 8, %s30
        %s401 = smul.u32 8, %s30
        %p402 = scmp.lt.s32.totalorder %s29, 1
        %s403 = scalar_select %p402, %s29, 1
        %p404 = scmp.lt.s32.totalorder %s401, 7
        %s405 = scalar_select %p404, %s401, 7
        %s406 = smul.addr %s403, 32
        %s407 = sadd.s32 %s405, %s406
        %s408 = smul.addr %s407, 4
        %s409 = scalar_lea.vmem %s6, %s408
        %s410 = smul.u32 8, %s30
        %v412 = vld [vmem:[%s307] sm:$0xf]
        %v413 = vld [vmem:[%s307 + $0x4] sm:$0xf]
        %v414 = vld [vmem:[%s307 + $0x8] sm:$0xf]
        %v415 = vld [vmem:[%s307 + $0xc] sm:$0xf]
        %v416 = vld [vmem:[%s307 + $0x10] sm:$0xf]
        %v417 = vld [vmem:[%s307 + $0x14] sm:$0xf]
        %v418 = vld [vmem:[%s307 + $0x18] sm:$0xf]
        %v419 = vld [vmem:[%s307 + $0x1c] sm:$0xf]
        %v420 = vld [vmem:[%s316] sm:$0xff]
        %v421 = vunpack.c.l.bf16 %v412
        %v422 = vunpack.c.l.bf16 %v413
        %v423 = vunpack.c.l.bf16 %v414
        %v424 = vunpack.c.l.bf16 %v415
        %v425 = vunpack.c.l.bf16 %v416
        %v426 = vunpack.c.l.bf16 %v417
        %v427 = vunpack.c.l.bf16 %v418
        %v428 = vunpack.c.l.bf16 %v419
        %v429 = vlaneseq
        %v430 = vshrl.u32 %v429, 7
        %v431 = vsub.s32 0, %v430
        %v432 = vrot.slane %v420, %v431
        %v433 = vmul.f32 %v421, %v432
        %v434 = vmul.f32 %v422, %v432
        %v435 = vmul.f32 %v423, %v432
        %v436 = vmul.f32 %v424, %v432
        %v437 = vmul.f32 %v425, %v432
        %v438 = vmul.f32 %v426, %v432
        %v439 = vmul.f32 %v427, %v432
        %v440 = vmul.f32 %v428, %v432
        %v441 = vlaneseq
        %v442 = vshrl.u32 %v441, 7
        %v443 = vsub.s32 1, %v442
        %v444 = vrot.slane %v420, %v443
        %v445 = vadd.f32 %v433, %v444
        %v446 = vadd.f32 %v434, %v444
        %v447 = vadd.f32 %v435, %v444
        %v448 = vadd.f32 %v436, %v444
        %v449 = vadd.f32 %v437, %v444
        %v450 = vadd.f32 %v438, %v444
        %v451 = vadd.f32 %v439, %v444
        %v452 = vadd.f32 %v440, %v444
        %v453 = vpack.c.bf16 %v446, %v445
        %v454 = vpack.c.bf16 %v448, %v447
        %v455 = vpack.c.bf16 %v450, %v449
        %v456 = vpack.c.bf16 %v452, %v451
        %v457 = vld [vmem:[#allocation6] sm:$0xff]
        %v458 = vld [vmem:[#allocation6 + $0x8] sm:$0xff]
        %v459 = vld [vmem:[#allocation6 + $0x10] sm:$0xff]
        %v460 = vld [vmem:[#allocation6 + $0x18] sm:$0xff]
        %v461 = vld [vmem:[#allocation6 + $0x20] sm:$0xff]
        %v462 = vld [vmem:[#allocation6 + $0x28] sm:$0xff]
        %v463 = vld [vmem:[#allocation6 + $0x30] sm:$0xff]
        %v464 = vld [vmem:[#allocation6 + $0x38] sm:$0xff]
        %v465 = vld [vmem:[#allocation7] ss:$8 sm:$0x3]
        %v467 = vlaneseq
        %v468 = vshrl.u32 %v467, 7
        %v469 = vsub.s32 0, %v468
        %v470 = vrot.slane %v465, %v469
        %v471 = vlaneseq
        %v472 = vshrl.u32 %v471, 7
        %v473 = vsub.s32 1, %v472
        %v474 = vrot.slane %v465, %v473
        %v485 = vunpack.c.l.b16 %v457
        %v486 = vunpack.c.h.b16 %v457
        %v487 = vunpack.c.l.b16 %v458
        %v488 = vunpack.c.h.b16 %v458
        %v489 = vunpack.c.l.b16 %v459
        %v490 = vunpack.c.h.b16 %v459
        %v491 = vunpack.c.l.b16 %v460
        %v492 = vunpack.c.h.b16 %v460
        %v493 = vunpack.c.l.b16 %v461
        %v494 = vunpack.c.h.b16 %v461
        %v495 = vunpack.c.l.b16 %v462
        %v496 = vunpack.c.h.b16 %v462
        %v497 = vunpack.c.l.b16 %v463
        %v498 = vunpack.c.h.b16 %v463
        %v499 = vunpack.c.l.b16 %v464
        %v500 = vunpack.c.h.b16 %v464
        %v501 = vpack.c.b16 %v487, %v485
        %v502 = vpack.c.b16 %v488, %v486
        %v503 = vpack.c.b16 %v491, %v489
        %v504 = vpack.c.b16 %v492, %v490
        %v505 = vpack.c.b16 %v495, %v493
        %v506 = vpack.c.b16 %v496, %v494
        %v507 = vpack.c.b16 %v499, %v497
        %v508 = vpack.c.b16 %v500, %v498
        %vm517 = vcmask 523264
        %v519 = vsel %vm517, %v453, 0
        %v522 = vsel %vm517, %v454, 0
        %v525 = vsel %vm517, %v455, 0
        %v528 = vsel %vm517, %v456, 0
        %530 = vmatprep.subr.bf16.mxu0 %v502
        %531 = vmatpush1.bf16.msra.mxu0 %v501
        %532 = vmatprep.subr.bf16.mxu0 %v504
        %533 = vmatpush1.bf16.msra.mxu0 %v503
        %534 = vmatprep.subr.bf16.mxu0 %v506
        %535 = vmatpush1.bf16.msra.mxu0 %v505
        %536 = vmatprep.subr.bf16.mxu0 %v508
        %537 = vmatpush1.bf16.msra.mxu0 %v507
        %538 = vmatprep.subr.bf16.mxu0 0
        %539 = vmatpush1.bf16.msra.mxu0 0
        %540 = vmatprep.subr.bf16.mxu0 0
        %541 = vmatpush1.bf16.msra.mxu0 0
        %542 = vmatprep.subr.bf16.mxu0 0
        %543 = vmatpush1.bf16.msra.mxu0 0
        %544 = vmatprep.subr.bf16.mxu0 0
        %545 = vmatpush1.bf16.msra.mxu0 0
        %546 = vmatprep.subr.bf16.mxu0 0
        %547 = vmatpush1.bf16.msra.mxu0 0
        %548 = vmatprep.subr.bf16.mxu0 0
        %549 = vmatpush1.bf16.msra.mxu0 0
        %550 = vmatprep.subr.bf16.mxu0 0
        %551 = vmatpush1.bf16.msra.mxu0 0
        %552 = vmatprep.subr.bf16.mxu0 0
        %553 = vmatpush1.bf16.msra.mxu0 0
        %554 = vmatprep.subr.bf16.mxu0 0
        %555 = vmatpush1.bf16.msra.mxu0 0
        %556 = vmatprep.subr.bf16.mxu0 0
        %557 = vmatpush1.bf16.msra.mxu0 0
        %558 = vmatprep.subr.bf16.mxu0 0
        %559 = vmatpush1.bf16.msra.mxu0 0
        %560 = vmatprep.subr.bf16.mxu0 0
        %561 = vmatpush1.bf16.msra.mxu0 0
        %562 = vmatprep.mubr.bf16.mxu0 0
        %563 = vmatmul.mubr.bf16.gmra.mrb[0].mxu0 %v519
        %v564 = vpop.f32.mrb[0].mxu0
        %v565 = vadd.f32 %v470, %v564
        %v566 = vpop.f32.mrb[0].mxu0
        %v567 = vadd.f32 %v474, %v566
        %v568 = vpop.f32.mrb[0].mxu0
        %v569 = vadd.f32 %v470, %v568
        %v570 = vpop.f32.mrb[0].mxu0
        %v571 = vadd.f32 %v474, %v570
        %572 = vmatprep.mubr.bf16.mxu0 0
        %573 = vmatmul.mubr.bf16.gmra.mrb[0].mxu0 %v522
        %v574 = vpop.f32.mrb[0].mxu0
        %v575 = vadd.f32 %v470, %v574
        %v576 = vpop.f32.mrb[0].mxu0
        %v577 = vadd.f32 %v474, %v576
        %v578 = vpop.f32.mrb[0].mxu0
        %v579 = vadd.f32 %v470, %v578
        %v580 = vpop.f32.mrb[0].mxu0
        %v581 = vadd.f32 %v474, %v580
        %582 = vmatprep.mubr.bf16.mxu0 0
        %583 = vmatmul.mubr.bf16.gmra.mrb[0].mxu0 %v525
        %v584 = vpop.f32.mrb[0].mxu0
        %v585 = vadd.f32 %v470, %v584
        %v586 = vpop.f32.mrb[0].mxu0
        %v587 = vadd.f32 %v474, %v586
        %v588 = vpop.f32.mrb[0].mxu0
        %v589 = vadd.f32 %v470, %v588
        %v590 = vpop.f32.mrb[0].mxu0
        %v591 = vadd.f32 %v474, %v590
        %592 = vmatprep.mubr.bf16.mxu0 0
        %593 = vmatmul.mubr.bf16.gmra.mrb[0].mxu0 %v528
        %v594 = vpop.f32.mrb[0].mxu0
        %v595 = vadd.f32 %v470, %v594
        %v596 = vpop.f32.mrb[0].mxu0
        %v597 = vadd.f32 %v474, %v596
        %v598 = vpop.f32.mrb[0].mxu0
        %v599 = vadd.f32 %v470, %v598
        %v600 = vpop.f32.mrb[0].mxu0
        %v601 = vadd.f32 %v474, %v600
        %602 = vdwg.mxu0
        %v603 = vpack.c.bf16 %v569, %v565
        %v604 = vpack.c.bf16 %v579, %v575
        %v605 = vpack.c.bf16 %v589, %v585
        %v606 = vpack.c.bf16 %v599, %v595
        %v611 = vunpack.c.l.b16 %v603
        %v612 = vunpack.c.h.b16 %v603
        %v613 = vunpack.c.l.b16 %v604
        %v614 = vunpack.c.h.b16 %v604
        %v615 = vunpack.c.l.b16 %v605
        %v616 = vunpack.c.h.b16 %v605
        %v617 = vunpack.c.l.b16 %v606
        %v618 = vunpack.c.h.b16 %v606
        %v619 = vpack.c.b16 %v611, %v611
        %v620 = vpack.c.b16 %v612, %v612
        %v621 = vpack.c.b16 %v613, %v613
        %v622 = vpack.c.b16 %v614, %v614
        %v623 = vpack.c.b16 %v615, %v615
        %v624 = vpack.c.b16 %v616, %v616
        %v625 = vpack.c.b16 %v617, %v617
        %v626 = vpack.c.b16 %v618, %v618
        %vm635 = vcmask 125952
        %636 = vst.msk [vmem:[%s389] sm:$0xf] %vm635, %v619
        %637 = vst.msk [vmem:[%s389 + $0x4] sm:$0xf] %vm635, %v620
        %638 = vst.msk [vmem:[%s389 + $0x8] sm:$0xf] %vm635, %v621
        %639 = vst.msk [vmem:[%s389 + $0xc] sm:$0xf] %vm635, %v622
        %640 = vst.msk [vmem:[%s389 + $0x10] sm:$0xf] %vm635, %v623
        %641 = vst.msk [vmem:[%s389 + $0x14] sm:$0xf] %vm635, %v624
        %642 = vst.msk [vmem:[%s389 + $0x18] sm:$0xf] %vm635, %v625
        %643 = vst.msk [vmem:[%s389 + $0x1c] sm:$0xf] %vm635, %v626
        %644 = vrot.lane.b32.xlu0 %v619, 64
        %v645 = vpop.permute.xlu0 %644
        %646 = vrot.lane.b32.xlu0 %v620, 64
        %v647 = vpop.permute.xlu0 %646
        %648 = vrot.lane.b32.xlu0 %v621, 64
        %v649 = vpop.permute.xlu0 %648
        %650 = vrot.lane.b32.xlu0 %v622, 64
        %v651 = vpop.permute.xlu0 %650
        %652 = vrot.lane.b32.xlu0 %v623, 64
        %v653 = vpop.permute.xlu0 %652
        %654 = vrot.lane.b32.xlu0 %v624, 64
        %v655 = vpop.permute.xlu0 %654
        %656 = vrot.lane.b32.xlu0 %v625, 64
        %v657 = vpop.permute.xlu0 %656
        %658 = vrot.lane.b32.xlu0 %v626, 64
        %v659 = vpop.permute.xlu0 %658
        %668 = vst.msk [vmem:[%s399] sm:$0xf] %vm635, %v645
        %669 = vst.msk [vmem:[%s399 + $0x4] sm:$0xf] %vm635, %v647
        %670 = vst.msk [vmem:[%s399 + $0x8] sm:$0xf] %vm635, %v649
        %671 = vst.msk [vmem:[%s399 + $0xc] sm:$0xf] %vm635, %v651
        %672 = vst.msk [vmem:[%s399 + $0x10] sm:$0xf] %vm635, %v653
        %673 = vst.msk [vmem:[%s399 + $0x14] sm:$0xf] %vm635, %v655
        %674 = vst.msk [vmem:[%s399 + $0x18] sm:$0xf] %vm635, %v657
        %675 = vst.msk [vmem:[%s399 + $0x1c] sm:$0xf] %vm635, %v659
        %v676 = vpack.c.bf16 %v571, %v567
        %v677 = vpack.c.bf16 %v581, %v577
        %v678 = vpack.c.bf16 %v591, %v587
        %v679 = vpack.c.bf16 %v601, %v597
        %v684 = vunpack.c.l.b16 %v676
        %v685 = vunpack.c.h.b16 %v676
        %v686 = vunpack.c.l.b16 %v677
        %v687 = vunpack.c.h.b16 %v677
        %v688 = vunpack.c.l.b16 %v678
        %v689 = vunpack.c.h.b16 %v678
        %v690 = vunpack.c.l.b16 %v679
        %v691 = vunpack.c.h.b16 %v679
        %v692 = vpack.c.b16 %v684, %v684
        %v693 = vpack.c.b16 %v685, %v685
        %v694 = vpack.c.b16 %v686, %v686
        %v695 = vpack.c.b16 %v687, %v687
        %v696 = vpack.c.b16 %v688, %v688
        %v697 = vpack.c.b16 %v689, %v689
        %v698 = vpack.c.b16 %v690, %v690
        %v699 = vpack.c.b16 %v691, %v691
        %708 = vst.msk [vmem:[%s409] sm:$0xf] %vm635, %v692
        %709 = vst.msk [vmem:[%s409 + $0x4] sm:$0xf] %vm635, %v693
        %710 = vst.msk [vmem:[%s409 + $0x8] sm:$0xf] %vm635, %v694
        %711 = vst.msk [vmem:[%s409 + $0xc] sm:$0xf] %vm635, %v695
        %712 = vst.msk [vmem:[%s409 + $0x10] sm:$0xf] %vm635, %v696
        %713 = vst.msk [vmem:[%s409 + $0x14] sm:$0xf] %vm635, %v697
        %714 = vst.msk [vmem:[%s409 + $0x18] sm:$0xf] %vm635, %v698
        %715 = vst.msk [vmem:[%s409 + $0x1c] sm:$0xf] %vm635, %v699
        %716 = vrot.lane.b32.xlu0 %v619, 112
        %v717 = vpop.permute.xlu0 %716
        %718 = vrot.lane.b32.xlu0 %v620, 112
        %v719 = vpop.permute.xlu0 %718
        %720 = vrot.lane.b32.xlu0 %v621, 112
        %v721 = vpop.permute.xlu0 %720
        %722 = vrot.lane.b32.xlu0 %v622, 112
        %v723 = vpop.permute.xlu0 %722
        %724 = vrot.lane.b32.xlu0 %v623, 112
        %v725 = vpop.permute.xlu0 %724
        %726 = vrot.lane.b32.xlu0 %v624, 112
        %v727 = vpop.permute.xlu0 %726
        %728 = vrot.lane.b32.xlu0 %v625, 112
        %v729 = vpop.permute.xlu0 %728
        %730 = vrot.lane.b32.xlu0 %v626, 112
        %v731 = vpop.permute.xlu0 %730
        %s740 = scalar_lea.vmem %s389, 32
        %741 = vst.msk [vmem:[%s740] sm:$0xf] %vm635, %v717
        %742 = vst.msk [vmem:[%s740 + $0x4] sm:$0xf] %vm635, %v719
        %743 = vst.msk [vmem:[%s740 + $0x8] sm:$0xf] %vm635, %v721
        %744 = vst.msk [vmem:[%s740 + $0xc] sm:$0xf] %vm635, %v723
        %745 = vst.msk [vmem:[%s740 + $0x10] sm:$0xf] %vm635, %v725
        %746 = vst.msk [vmem:[%s740 + $0x14] sm:$0xf] %vm635, %v727
        %747 = vst.msk [vmem:[%s740 + $0x18] sm:$0xf] %vm635, %v729
        %748 = vst.msk [vmem:[%s740 + $0x1c] sm:$0xf] %vm635, %v731
        %749 = vrot.lane.b32.xlu0 %v619, 48
        %v750 = vpop.permute.xlu0 %749
        %751 = vrot.lane.b32.xlu0 %v620, 48
        %v752 = vpop.permute.xlu0 %751
        %753 = vrot.lane.b32.xlu0 %v621, 48
        %v754 = vpop.permute.xlu0 %753
        %755 = vrot.lane.b32.xlu0 %v622, 48
        %v756 = vpop.permute.xlu0 %755
        %757 = vrot.lane.b32.xlu0 %v623, 48
        %v758 = vpop.permute.xlu0 %757
        %759 = vrot.lane.b32.xlu0 %v624, 48
        %v760 = vpop.permute.xlu0 %759
        %761 = vrot.lane.b32.xlu0 %v625, 48
        %v762 = vpop.permute.xlu0 %761
        %763 = vrot.lane.b32.xlu0 %v626, 48
        %v764 = vpop.permute.xlu0 %763
        %s773 = scalar_lea.vmem %s399, 32
        %774 = vst.msk [vmem:[%s773] sm:$0xf] %vm635, %v750
        %775 = vst.msk [vmem:[%s773 + $0x4] sm:$0xf] %vm635, %v752
        %776 = vst.msk [vmem:[%s773 + $0x8] sm:$0xf] %vm635, %v754
        %777 = vst.msk [vmem:[%s773 + $0xc] sm:$0xf] %vm635, %v756
        %778 = vst.msk [vmem:[%s773 + $0x10] sm:$0xf] %vm635, %v758
        %779 = vst.msk [vmem:[%s773 + $0x14] sm:$0xf] %vm635, %v760
        %780 = vst.msk [vmem:[%s773 + $0x18] sm:$0xf] %vm635, %v762
        %781 = vst.msk [vmem:[%s773 + $0x1c] sm:$0xf] %vm635, %v764
        %782 = vrot.lane.b32.xlu0 %v692, 112
        %v783 = vpop.permute.xlu0 %782
        %784 = vrot.lane.b32.xlu0 %v693, 112
        %v785 = vpop.permute.xlu0 %784
        %786 = vrot.lane.b32.xlu0 %v694, 112
        %v787 = vpop.permute.xlu0 %786
        %788 = vrot.lane.b32.xlu0 %v695, 112
        %v789 = vpop.permute.xlu0 %788
        %790 = vrot.lane.b32.xlu0 %v696, 112
        %v791 = vpop.permute.xlu0 %790
        %792 = vrot.lane.b32.xlu0 %v697, 112
        %v793 = vpop.permute.xlu0 %792
        %794 = vrot.lane.b32.xlu0 %v698, 112
        %v795 = vpop.permute.xlu0 %794
        %796 = vrot.lane.b32.xlu0 %v699, 112
        %v797 = vpop.permute.xlu0 %796
        %s806 = scalar_lea.vmem %s409, 32
        %807 = vst.msk [vmem:[%s806] sm:$0xf] %vm635, %v783
        %808 = vst.msk [vmem:[%s806 + $0x4] sm:$0xf] %vm635, %v785
        %809 = vst.msk [vmem:[%s806 + $0x8] sm:$0xf] %vm635, %v787
        %810 = vst.msk [vmem:[%s806 + $0xc] sm:$0xf] %vm635, %v789
        %811 = vst.msk [vmem:[%s806 + $0x10] sm:$0xf] %vm635, %v791
        %812 = vst.msk [vmem:[%s806 + $0x14] sm:$0xf] %vm635, %v793
        %813 = vst.msk [vmem:[%s806 + $0x18] sm:$0xf] %vm635, %v795
        %814 = vst.msk [vmem:[%s806 + $0x1c] sm:$0xf] %vm635, %v797
        %815 = vrot.lane.b32.xlu0 %v619, 96
        %v816 = vpop.permute.xlu0 %815
        %817 = vrot.lane.b32.xlu0 %v620, 96
        %v818 = vpop.permute.xlu0 %817
        %819 = vrot.lane.b32.xlu0 %v621, 96
        %v820 = vpop.permute.xlu0 %819
        %821 = vrot.lane.b32.xlu0 %v622, 96
        %v822 = vpop.permute.xlu0 %821
        %823 = vrot.lane.b32.xlu0 %v623, 96
        %v824 = vpop.permute.xlu0 %823
        %825 = vrot.lane.b32.xlu0 %v624, 96
        %v826 = vpop.permute.xlu0 %825
        %827 = vrot.lane.b32.xlu0 %v625, 96
        %v828 = vpop.permute.xlu0 %827
        %829 = vrot.lane.b32.xlu0 %v626, 96
        %v830 = vpop.permute.xlu0 %829
        %s839 = scalar_lea.vmem %s389, 64
        %840 = vst.msk [vmem:[%s839] sm:$0xf] %vm635, %v816
        %841 = vst.msk [vmem:[%s839 + $0x4] sm:$0xf] %vm635, %v818
        %842 = vst.msk [vmem:[%s839 + $0x8] sm:$0xf] %vm635, %v820
        %843 = vst.msk [vmem:[%s839 + $0xc] sm:$0xf] %vm635, %v822
        %844 = vst.msk [vmem:[%s839 + $0x10] sm:$0xf] %vm635, %v824
        %845 = vst.msk [vmem:[%s839 + $0x14] sm:$0xf] %vm635, %v826
        %846 = vst.msk [vmem:[%s839 + $0x18] sm:$0xf] %vm635, %v828
        %847 = vst.msk [vmem:[%s839 + $0x1c] sm:$0xf] %vm635, %v830
        %848 = vrot.lane.b32.xlu0 %v619, 32
        %v849 = vpop.permute.xlu0 %848
        %850 = vrot.lane.b32.xlu0 %v620, 32
        %v851 = vpop.permute.xlu0 %850
        %852 = vrot.lane.b32.xlu0 %v621, 32
        %v853 = vpop.permute.xlu0 %852
        %854 = vrot.lane.b32.xlu0 %v622, 32
        %v855 = vpop.permute.xlu0 %854
        %856 = vrot.lane.b32.xlu0 %v623, 32
        %v857 = vpop.permute.xlu0 %856
        %858 = vrot.lane.b32.xlu0 %v624, 32
        %v859 = vpop.permute.xlu0 %858
        %860 = vrot.lane.b32.xlu0 %v625, 32
        %v861 = vpop.permute.xlu0 %860
        %862 = vrot.lane.b32.xlu0 %v626, 32
        %v863 = vpop.permute.xlu0 %862
        %s872 = scalar_lea.vmem %s399, 64
        %873 = vst.msk [vmem:[%s872] sm:$0xf] %vm635, %v849
        %874 = vst.msk [vmem:[%s872 + $0x4] sm:$0xf] %vm635, %v851
        %875 = vst.msk [vmem:[%s872 + $0x8] sm:$0xf] %vm635, %v853
        %876 = vst.msk [vmem:[%s872 + $0xc] sm:$0xf] %vm635, %v855
        %877 = vst.msk [vmem:[%s872 + $0x10] sm:$0xf] %vm635, %v857
        %878 = vst.msk [vmem:[%s872 + $0x14] sm:$0xf] %vm635, %v859
        %879 = vst.msk [vmem:[%s872 + $0x18] sm:$0xf] %vm635, %v861
        %880 = vst.msk [vmem:[%s872 + $0x1c] sm:$0xf] %vm635, %v863
        %881 = vrot.lane.b32.xlu0 %v692, 96
        %v882 = vpop.permute.xlu0 %881
        %883 = vrot.lane.b32.xlu0 %v693, 96
        %v884 = vpop.permute.xlu0 %883
        %885 = vrot.lane.b32.xlu0 %v694, 96
        %v886 = vpop.permute.xlu0 %885
        %887 = vrot.lane.b32.xlu0 %v695, 96
        %v888 = vpop.permute.xlu0 %887
        %889 = vrot.lane.b32.xlu0 %v696, 96
        %v890 = vpop.permute.xlu0 %889
        %891 = vrot.lane.b32.xlu0 %v697, 96
        %v892 = vpop.permute.xlu0 %891
        %893 = vrot.lane.b32.xlu0 %v698, 96
        %v894 = vpop.permute.xlu0 %893
        %895 = vrot.lane.b32.xlu0 %v699, 96
        %v896 = vpop.permute.xlu0 %895
        %s905 = scalar_lea.vmem %s409, 64
        %906 = vst.msk [vmem:[%s905] sm:$0xf] %vm635, %v882
        %907 = vst.msk [vmem:[%s905 + $0x4] sm:$0xf] %vm635, %v884
        %908 = vst.msk [vmem:[%s905 + $0x8] sm:$0xf] %vm635, %v886
        %909 = vst.msk [vmem:[%s905 + $0xc] sm:$0xf] %vm635, %v888
        %910 = vst.msk [vmem:[%s905 + $0x10] sm:$0xf] %vm635, %v890
        %911 = vst.msk [vmem:[%s905 + $0x14] sm:$0xf] %vm635, %v892
        %912 = vst.msk [vmem:[%s905 + $0x18] sm:$0xf] %vm635, %v894
        %913 = vst.msk [vmem:[%s905 + $0x1c] sm:$0xf] %vm635, %v896
        %914 = vrot.lane.b32.xlu0 %v619, 80
        %v915 = vpop.permute.xlu0 %914
        %916 = vrot.lane.b32.xlu0 %v620, 80
        %v917 = vpop.permute.xlu0 %916
        %918 = vrot.lane.b32.xlu0 %v621, 80
        %v919 = vpop.permute.xlu0 %918
        %920 = vrot.lane.b32.xlu0 %v622, 80
        %v921 = vpop.permute.xlu0 %920
        %922 = vrot.lane.b32.xlu0 %v623, 80
        %v923 = vpop.permute.xlu0 %922
        %924 = vrot.lane.b32.xlu0 %v624, 80
        %v925 = vpop.permute.xlu0 %924
        %926 = vrot.lane.b32.xlu0 %v625, 80
        %v927 = vpop.permute.xlu0 %926
        %928 = vrot.lane.b32.xlu0 %v626, 80
        %v929 = vpop.permute.xlu0 %928
        %s938 = scalar_lea.vmem %s389, 96
        %939 = vst.msk [vmem:[%s938] sm:$0xf] %vm635, %v915
        %940 = vst.msk [vmem:[%s938 + $0x4] sm:$0xf] %vm635, %v917
        %941 = vst.msk [vmem:[%s938 + $0x8] sm:$0xf] %vm635, %v919
        %942 = vst.msk [vmem:[%s938 + $0xc] sm:$0xf] %vm635, %v921
        %943 = vst.msk [vmem:[%s938 + $0x10] sm:$0xf] %vm635, %v923
        %944 = vst.msk [vmem:[%s938 + $0x14] sm:$0xf] %vm635, %v925
        %945 = vst.msk [vmem:[%s938 + $0x18] sm:$0xf] %vm635, %v927
        %946 = vst.msk [vmem:[%s938 + $0x1c] sm:$0xf] %vm635, %v929
        %947 = vrot.lane.b32.xlu0 %v619, 16
        %v948 = vpop.permute.xlu0 %947
        %949 = vrot.lane.b32.xlu0 %v620, 16
        %v950 = vpop.permute.xlu0 %949
        %951 = vrot.lane.b32.xlu0 %v621, 16
        %v952 = vpop.permute.xlu0 %951
        %953 = vrot.lane.b32.xlu0 %v622, 16
        %v954 = vpop.permute.xlu0 %953
        %955 = vrot.lane.b32.xlu0 %v623, 16
        %v956 = vpop.permute.xlu0 %955
        %957 = vrot.lane.b32.xlu0 %v624, 16
        %v958 = vpop.permute.xlu0 %957
        %959 = vrot.lane.b32.xlu0 %v625, 16
        %v960 = vpop.permute.xlu0 %959
        %961 = vrot.lane.b32.xlu0 %v626, 16
        %v962 = vpop.permute.xlu0 %961
        %s971 = scalar_lea.vmem %s399, 96
        %972 = vst.msk [vmem:[%s971] sm:$0xf] %vm635, %v948
        %973 = vst.msk [vmem:[%s971 + $0x4] sm:$0xf] %vm635, %v950
        %974 = vst.msk [vmem:[%s971 + $0x8] sm:$0xf] %vm635, %v952
        %975 = vst.msk [vmem:[%s971 + $0xc] sm:$0xf] %vm635, %v954
        %976 = vst.msk [vmem:[%s971 + $0x10] sm:$0xf] %vm635, %v956
        %977 = vst.msk [vmem:[%s971 + $0x14] sm:$0xf] %vm635, %v958
        %978 = vst.msk [vmem:[%s971 + $0x18] sm:$0xf] %vm635, %v960
        %979 = vst.msk [vmem:[%s971 + $0x1c] sm:$0xf] %vm635, %v962
        %980 = vrot.lane.b32.xlu0 %v692, 80
        %v981 = vpop.permute.xlu0 %980
        %982 = vrot.lane.b32.xlu0 %v693, 80
        %v983 = vpop.permute.xlu0 %982
        %984 = vrot.lane.b32.xlu0 %v694, 80
        %v985 = vpop.permute.xlu0 %984
        %986 = vrot.lane.b32.xlu0 %v695, 80
        %v987 = vpop.permute.xlu0 %986
        %988 = vrot.lane.b32.xlu0 %v696, 80
        %v989 = vpop.permute.xlu0 %988
        %990 = vrot.lane.b32.xlu0 %v697, 80
        %v991 = vpop.permute.xlu0 %990
        %992 = vrot.lane.b32.xlu0 %v698, 80
        %v993 = vpop.permute.xlu0 %992
        %994 = vrot.lane.b32.xlu0 %v699, 80
        %v995 = vpop.permute.xlu0 %994
        %s1004 = scalar_lea.vmem %s409, 96
        %1005 = vst.msk [vmem:[%s1004] sm:$0xf] %vm635, %v981
        %1006 = vst.msk [vmem:[%s1004 + $0x4] sm:$0xf] %vm635, %v983
        %1007 = vst.msk [vmem:[%s1004 + $0x8] sm:$0xf] %vm635, %v985
        %1008 = vst.msk [vmem:[%s1004 + $0xc] sm:$0xf] %vm635, %v987
        %1009 = vst.msk [vmem:[%s1004 + $0x10] sm:$0xf] %vm635, %v989
        %1010 = vst.msk [vmem:[%s1004 + $0x14] sm:$0xf] %vm635, %v991
        %1011 = vst.msk [vmem:[%s1004 + $0x18] sm:$0xf] %vm635, %v993
        %1012 = vst.msk [vmem:[%s1004 + $0x1c] sm:$0xf] %vm635, %v995
        %s1013 = smul.u32 8, %s30
        %p1014 = scmp.lt.s32.totalorder %s29, 1
        %s1015 = scalar_select %p1014, %s29, 1
        %p1016 = scmp.lt.s32.totalorder %s1013, 7
        %s1017 = scalar_select %p1016, %s1013, 7
        %s1018 = smul.addr %s1015, 32
        %s1019 = sadd.s32 %s1017, %s1018
        %s1020 = smul.addr %s1019, 4
        %s1021 = scalar_lea.vmem %s4, %s1020
        %s1022 = smul.u32 8, %s30
        %p1023 = scmp.lt.s32.totalorder %s29, 1
        %s1024 = scalar_select %p1023, %s29, 1
        %p1025 = scmp.lt.s32.totalorder %s1022, 7
        %s1026 = scalar_select %p1025, %s1022, 7
        %s1027 = smul.addr %s1024, 32
        %s1028 = sadd.s32 %s1026, %s1027
        %s1029 = smul.addr %s1028, 4
        %s1030 = scalar_lea.vmem %s5, %s1029
        %s1031 = smul.u32 8, %s30
        %p1032 = scmp.lt.s32.totalorder %s29, 1
        %s1033 = scalar_select %p1032, %s29, 1
        %p1034 = scmp.lt.s32.totalorder %s1031, 7
        %s1035 = scalar_select %p1034, %s1031, 7
        %s1036 = smul.addr %s1033, 32
        %s1037 = sadd.s32 %s1035, %s1036
        %s1038 = smul.addr %s1037, 4
        %s1039 = scalar_lea.vmem %s6, %s1038
        // Predicated region
        $region53: #{tpu_custom_call.1} parent=35 // pred_check
          %p1040 = pneg %p153
        $region54: #{tpu_custom_call.1} parent=35 // pred_check_branch
          %1042 = sbr.rel (%p1040) target = $region56
        $region55: #{tpu_custom_call.1} parent=35 // pred_region
          %s1043 = smul.u32 8, %s30
        $region56: #{tpu_custom_call.1} parent=35 // pred_fallthru
          _
        // Predicated region
        $region57: #{tpu_custom_call.1} parent=35 // pred_check
          %p1044 = pneg %p181
        $region58: #{tpu_custom_call.1} parent=35 // pred_check_branch
          %1046 = sbr.rel (%p1044) target = $region60
        $region59: #{tpu_custom_call.1} parent=35 // pred_region
          %s1047 = smul.u32 8, %s30
        $region60: #{tpu_custom_call.1} parent=35 // pred_fallthru
          _
        // Predicated region
        $region61: #{tpu_custom_call.1} parent=35 // pred_check
          %p1048 = pneg %p209
        $region62: #{tpu_custom_call.1} parent=35 // pred_check_branch
          %1050 = sbr.rel (%p1048) target = $region64
        $region63: #{tpu_custom_call.1} parent=35 // pred_region
          %s1051 = smul.u32 8, %s30
        $region64: #{tpu_custom_call.1} parent=35 // pred_fallthru
          _
      $region36: #{tpu_custom_call.1} parent=5 // pred_fallthru
        _
      %p1052 = scmp.le.s32.totalorder 2, %s20
      // Predicated region
      $region65: #{tpu_custom_call.1} parent=5 // pred_check
        %p1053 = pneg %p1052
      $region66: #{tpu_custom_call.1} parent=5 // pred_check_branch
        %1055 = sbr.rel (%p1053) target = $region68
      $region67: #{tpu_custom_call.1} parent=5 // pred_region
        %s1056 = ssub.s32 %s20, 2
        // Predicated region
        $region69: #{tpu_custom_call.1} parent=67 // pred_check
          %p1057 = pneg %p159
        $region70: #{tpu_custom_call.1} parent=67 // pred_check_branch
          %1059 = sbr.rel (%p1057) target = $region72
        $region71: #{tpu_custom_call.1} parent=67 // pred_region
          %s1060 = smul.u32 8, %s32
          %p1061 = scmp.lt.s32.totalorder %s31, 1
          %s1062 = scalar_select %p1061, %s31, 1
          %p1063 = scmp.lt.s32.totalorder %s1060, 7
          %s1064 = scalar_select %p1063, %s1060, 7
          %s1065 = smul.addr %s1062, 32
          %s1066 = sadd.s32 %s1064, %s1065
          %s1067 = smul.addr %s1066, 4
          %s1068 = scalar_lea.vmem %s4, %s1067
        $region72: #{tpu_custom_call.1} parent=67 // pred_fallthru
          _
        // Predicated region
        $region73: #{tpu_custom_call.1} parent=67 // pred_check
          %p1069 = pneg %p187
        $region74: #{tpu_custom_call.1} parent=67 // pred_check_branch
          %1071 = sbr.rel (%p1069) target = $region76
        $region75: #{tpu_custom_call.1} parent=67 // pred_region
          %s1072 = smul.u32 8, %s32
          %p1073 = scmp.lt.s32.totalorder %s31, 1
          %s1074 = scalar_select %p1073, %s31, 1
          %p1075 = scmp.lt.s32.totalorder %s1072, 7
          %s1076 = scalar_select %p1075, %s1072, 7
          %s1077 = smul.addr %s1074, 32
          %s1078 = sadd.s32 %s1076, %s1077
          %s1079 = smul.addr %s1078, 4
          %s1080 = scalar_lea.vmem %s5, %s1079
        $region76: #{tpu_custom_call.1} parent=67 // pred_fallthru
          _
        // Predicated region
        $region77: #{tpu_custom_call.1} parent=67 // pred_check
          %p1081 = pneg %p215
        $region78: #{tpu_custom_call.1} parent=67 // pred_check_branch
          %1083 = sbr.rel (%p1081) target = $region80
        $region79: #{tpu_custom_call.1} parent=67 // pred_region
          %s1084 = smul.u32 8, %s32
          %p1085 = scmp.lt.s32.totalorder %s31, 1
          %s1086 = scalar_select %p1085, %s31, 1
          %p1087 = scmp.lt.s32.totalorder %s1084, 7
          %s1088 = scalar_select %p1087, %s1084, 7
          %s1089 = smul.addr %s1086, 32
          %s1090 = sadd.s32 %s1088, %s1089
          %s1091 = smul.addr %s1090, 4
          %s1092 = scalar_lea.vmem %s6, %s1091
        $region80: #{tpu_custom_call.1} parent=67 // pred_fallthru
          _
      $region68: #{tpu_custom_call.1} parent=5 // pred_fallthru
        _
    $region6: #{tpu_custom_call.1} parent=1 // loop_footer
      %s24 = sadd.s32 1, %s20
    $region7: #{tpu_custom_call.1} parent=1 // loop_footer_branch
      %19 = sbr.rel target = $region3
    $region8: #{tpu_custom_call.1} parent=1 // loop_exit
      _
    %1093 = vsyncpa [#allocation3], 1
    %s1094 = scalar_lea.sflag [#allocation3], 1
    %1095 = vsyncpa %s1094, 1
    %1096 = vsyncpa [#allocation5], 1
    %s1097 = scalar_lea.sflag [#allocation5], 1
    %1098 = vsyncpa %s1097, 1
    %1099 = vsyncpa [#allocation8], 1

</llo_original>
